<compile_context>
chip_gen: v7x
topology: tpu7x:2x2x1
jax: 0.10.0
libtpu: 0.0.40
codegen_flags: <defaults>
</compile_context>

<pallas_src>
import math
import functools

import jax
import jax.numpy as jnp
from jax.experimental import pallas as pl
from jax.experimental.pallas import tpu as pltpu


def mha_kernel(xq_ref, xk_ref, xv_ref, bias_ref,
               wq_ref, bq_ref, wk_ref, bk_ref, wv_ref, bv_ref,
               wo_ref, bo_ref,
               o_ref, *, num_heads):
    TB, S, D = xq_ref.shape
    H = num_heads
    dk = D // H
    M = TB * S
    HB = H * TB
    bf16 = jnp.bfloat16
    f32 = jnp.float32

    def project_heads(x_ref, w_ref, b_ref):
        # (TB, S, D) -> (TB*S, D); activations arrive already in bf16.
        x2d = x_ref[...].reshape(M, D)
        # H full-depth (K=D) matmuls against pre-split per-head weights; no
        # lane sub-slicing of the activations.  Stacked along a new leading
        # (head) axis, bias added and bf16 cast applied exactly once.
        y = jnp.stack(
            [jnp.dot(x2d, w_ref[h], preferred_element_type=f32) for h in range(H)],
            axis=0)                                       # (H, M, dk) f32
        y = y + b_ref[...]                                # (H, 1, dk) bias
        return y.astype(bf16)

    # 1/sqrt(dk) is pre-folded into wq/bq by the wrapper.
    q = project_heads(xq_ref, wq_ref, bq_ref).reshape(HB, S, dk)
    k = project_heads(xk_ref, wk_ref, bk_ref).reshape(HB, S, dk)
    v = project_heads(xv_ref, wv_ref, bv_ref).reshape(HB, S, dk)

    # Additive key-mask bias replicated over heads once (tiny: (HB, 1, S)).
    bias = jnp.broadcast_to(bias_ref[...][None], (H, TB, 1, S)).reshape(HB, 1, S)

    # Scores for all heads/batches in one batched MXU op; f32 accumulation.
    s = jnp.einsum('bqd,bkd->bqk', q, k, preferred_element_type=f32)  # (HB,S,S)
    s = s + bias                                       # broadcast over queries
    s = s - jnp.max(s, axis=-1, keepdims=True)         # stable softmax in f32
    p = jnp.exp(s)
    attn = p * pl.reciprocal(jnp.sum(p, axis=-1, keepdims=True), approx=True)

    ctx = jnp.einsum('bqk,bkd->bqd', attn.astype(bf16), v,
                     preferred_element_type=f32)       # (HB, S, dk) f32

    # Output projection: one head-batched matmul against (H, dk, D) and a
    # single reduction over heads (no per-head accumulation loop).
    ctx3 = ctx.astype(bf16).reshape(H, M, dk)
    out_h = jnp.einsum('hmd,hdn->hmn', ctx3, wo_ref[...],
                       preferred_element_type=f32)     # (H, M, D)
    out2d = jnp.sum(out_h, axis=0) + bo_ref[...]       # (M, D) + (1, D)
    o_ref[...] = out2d.reshape(TB, S, D).astype(o_ref.dtype)


def multi_head_attention(q, k, v, mask, params, *, num_heads, block_b=None):
    B, S, D = q.shape
    H = num_heads
    dk = D // H
    if block_b is None:
        # >= 2 grid steps so both v7x TensorCores get work; on single-TC chips
        # (v5e/v6e) prefer the largest block_b that fits VMEM -- override there.
        block_b = max(1, B // 2)
    assert B % block_b == 0, "choose block_b dividing B (avoids softmax on padded rows)"
    grid_b = B // block_b

    bf16 = jnp.bfloat16
    f32 = jnp.float32
    inv_sqrt_dk = 1.0 / math.sqrt(dk)

    # Additive key-mask bias: 0 where mask==1, -1e9 where mask==0.
    # (Added before the row-max subtraction: not bit-identical to masked_fill,
    #  but equivalent after softmax for O(1) scores.)
    if mask is None:
        bias = jnp.zeros((B, 1, S), f32)
    else:
        bias = ((mask.astype(f32) - 1.0) * 1e9).reshape(B, 1, S)

    # Per-head weight slices (done on host, free); 1/sqrt(dk) folded into the
    # q projection so the kernel never scales the score tile.
    wq3 = (params["wq"] * inv_sqrt_dk).reshape(D, H, dk).transpose(1, 0, 2).astype(bf16)
    wk3 = params["wk"].reshape(D, H, dk).transpose(1, 0, 2).astype(bf16)
    wv3 = params["wv"].reshape(D, H, dk).transpose(1, 0, 2).astype(bf16)
    wo3 = params["wo"].reshape(H, dk, D).astype(bf16)
    bq3 = (params["bq"] * inv_sqrt_dk).reshape(H, 1, dk).astype(f32)
    bk3 = params["bk"].reshape(H, 1, dk).astype(f32)
    bv3 = params["bv"].reshape(H, 1, dk).astype(f32)
    bo = params["bo"].reshape(1, D).astype(f32)

    # Activations cross the boundary in bf16 (they feed the MXU directly).
    q_bf, k_bf, v_bf = (x.astype(bf16) for x in (q, k, v))

    kernel = functools.partial(mha_kernel, num_heads=H)

    def rep2(shape):
        return pl.BlockSpec(shape, lambda i: (0, 0))

    def rep3(shape):
        return pl.BlockSpec(shape, lambda i: (0, 0, 0))

    in_specs = [
        pl.BlockSpec((block_b, S, D), lambda i: (i, 0, 0)),   # q (bf16)
        pl.BlockSpec((block_b, S, D), lambda i: (i, 0, 0)),   # k (bf16)
        pl.BlockSpec((block_b, S, D), lambda i: (i, 0, 0)),   # v (bf16)
        pl.BlockSpec((block_b, 1, S), lambda i: (i, 0, 0)),   # additive mask bias
        rep3((H, D, dk)), rep3((H, 1, dk)),                   # wq3, bq3 (scaled)
        rep3((H, D, dk)), rep3((H, 1, dk)),                   # wk3, bk3
        rep3((H, D, dk)), rep3((H, 1, dk)),                   # wv3, bv3
        rep3((H, dk, D)), rep2((1, D)),                       # wo3, bo
    ]
    out_spec = pl.BlockSpec((block_b, S, D), lambda i: (i, 0, 0))

    return pl.pallas_call(
        kernel,
        out_shape=jax.ShapeDtypeStruct((B, S, D), jnp.float32),
        grid_spec=pltpu.PrefetchScalarGridSpec(
            num_scalar_prefetch=0,
            grid=(grid_b,),
            in_specs=in_specs,
            out_specs=out_spec),
        compiler_params=pltpu.CompilerParams(
            dimension_semantics=("parallel",)),
    )(q_bf, k_bf, v_bf, bias, wq3, bq3, wk3, bk3, wv3, bv3, wo3, bo)


def reference(q, k, v, mask, params, num_heads):
    """Pure-JAX f32 replica of the PyTorch Multi_Head_Attention forward."""
    B, S, D = q.shape
    dk = D // num_heads

    def lin(x, w, b):
        return x @ w + b

    qh = lin(q, params["wq"], params["bq"]).reshape(B, S, num_heads, dk).transpose(0, 2, 1, 3)
    kh = lin(k, params["wk"], params["bk"]).reshape(B, S, num_heads, dk).transpose(0, 2, 1, 3)
    vh = lin(v, params["wv"], params["bv"]).reshape(B, S, num_heads, dk).transpose(0, 2, 1, 3)
    scores = jnp.einsum("bhqd,bhkd->bhqk", qh, kh) / math.sqrt(dk)
    if mask is not None:
        scores = jnp.where(mask[:, None, None, :] == 0, -1000000000.0, scores)
    attn = jax.nn.softmax(scores, axis=-1)
    out = jnp.einsum("bhqk,bhkd->bhqd", attn, vh).transpose(0, 2, 1, 3).reshape(B, S, D)
    return lin(out, params["wo"], params["bo"])


if __name__ == "__main__":
    B, S, D, H = 4, 8, 32, 4
    key = jax.random.PRNGKey(0)
    keys = jax.random.split(key, 16)

    def w(kk, shape, scale=0.1):
        return jax.random.normal(kk, shape, jnp.float32) * scale

    params = {
        "wq": w(keys[0], (D, D)), "bq": w(keys[1], (1, D)),
        "wk": w(keys[2], (D, D)), "bk": w(keys[3], (1, D)),
        "wv": w(keys[4], (D, D)), "bv": w(keys[5], (1, D)),
        "wo": w(keys[6], (D, D)), "bo": w(keys[7], (1, D)),
    }

    q = jax.random.normal(keys[8], (B, S, D), jnp.float32)
    k = jax.random.normal(keys[9], (B, S, D), jnp.float32)
    v = jax.random.normal(keys[10], (B, S, D), jnp.float32)
    mask = (jax.random.uniform(keys[11], (B, S)) > 0.25).astype(jnp.float32)
    mask = mask.at[:, 0].set(1.0)   # keep at least one unmasked key per batch

    out = multi_head_attention(q, k, v, mask, params, num_heads=H, block_b=2)
    out = jax.block_until_ready(out)

    ref = reference(q, k, v, mask, params, H)
    err = float(jnp.max(jnp.abs(out - ref)))
    # bf16 matmul operands + approximate EUP reciprocal vs. f32 reference
    # -> relaxed tolerance.
    assert jnp.allclose(out, ref, atol=5e-2, rtol=5e-2), f"max abs err {err}"
    print("KERNEL_OK")
</pallas_src>

<mosaic_0001>
module attributes {stable_mosaic.version = 11 : i64} {
  func.func @mha_kernel(%arg0: i32, %arg1: memref<2x8x32xbf16, #tpu.memory_space<vmem>>, %arg2: memref<2x8x32xbf16, #tpu.memory_space<vmem>>, %arg3: memref<2x8x32xbf16, #tpu.memory_space<vmem>>, %arg4: memref<2x1x8xf32, #tpu.memory_space<vmem>>, %arg5: memref<4x32x8xbf16, #tpu.memory_space<vmem>>, %arg6: memref<4x1x8xf32, #tpu.memory_space<vmem>>, %arg7: memref<4x32x8xbf16, #tpu.memory_space<vmem>>, %arg8: memref<4x1x8xf32, #tpu.memory_space<vmem>>, %arg9: memref<4x32x8xbf16, #tpu.memory_space<vmem>>, %arg10: memref<4x1x8xf32, #tpu.memory_space<vmem>>, %arg11: memref<4x8x32xbf16, #tpu.memory_space<vmem>>, %arg12: memref<1x32xf32, #tpu.memory_space<vmem>>, %arg13: memref<2x8x32xf32, #tpu.memory_space<vmem>>) attributes {dimension_semantics = [#tpu.dimension_semantics<parallel>], iteration_bounds = array<i64: 2>, scalar_prefetch = 0 : i64, scratch_operands = 0 : i64, tpu.core_type = #tpu.core_type<tc>, window_params = [{transform_indices = @transform_0, window_bounds = array<i64: 2, 8, 32>}, {transform_indices = @transform_1, window_bounds = array<i64: 2, 8, 32>}, {transform_indices = @transform_2, window_bounds = array<i64: 2, 8, 32>}, {transform_indices = @transform_3, window_bounds = array<i64: 2, 1, 8>}, {pipeline_mode = #tpu.pipeline_mode<synchronous>, transform_indices = @transform_4, window_bounds = array<i64: 4, 32, 8>}, {pipeline_mode = #tpu.pipeline_mode<synchronous>, transform_indices = @transform_5, window_bounds = array<i64: 4, 1, 8>}, {pipeline_mode = #tpu.pipeline_mode<synchronous>, transform_indices = @transform_6, window_bounds = array<i64: 4, 32, 8>}, {pipeline_mode = #tpu.pipeline_mode<synchronous>, transform_indices = @transform_7, window_bounds = array<i64: 4, 1, 8>}, {pipeline_mode = #tpu.pipeline_mode<synchronous>, transform_indices = @transform_8, window_bounds = array<i64: 4, 32, 8>}, {pipeline_mode = #tpu.pipeline_mode<synchronous>, transform_indices = @transform_9, window_bounds = array<i64: 4, 1, 8>}, {pipeline_mode = #tpu.pipeline_mode<synchronous>, transform_indices = @transform_10, window_bounds = array<i64: 4, 8, 32>}, {pipeline_mode = #tpu.pipeline_mode<synchronous>, transform_indices = @transform_11, window_bounds = array<i64: 1, 32>}, {transform_indices = @transform_12, window_bounds = array<i64: 2, 8, 32>}]} {
    %c0 = arith.constant 0 : index
    %c0_0 = arith.constant 0 : index
    %c0_1 = arith.constant 0 : index
    %0 = vector.load %arg1[%c0, %c0_0, %c0_1] : memref<2x8x32xbf16, #tpu.memory_space<vmem>>, vector<2x8x32xbf16>
    %1 = vector.shape_cast %0 : vector<2x8x32xbf16> to vector<16x32xbf16>
    %c0_2 = arith.constant 0 : index
    %c0_3 = arith.constant 0 : index
    %c0_4 = arith.constant 0 : index
    %2 = vector.load %arg5[%c0_2, %c0_3, %c0_4] : memref<4x32x8xbf16, #tpu.memory_space<vmem>>, vector<1x32x8xbf16>
    %3 = vector.shape_cast %2 : vector<1x32x8xbf16> to vector<32x8xbf16>
    %cst = arith.constant dense<0.000000e+00> : vector<16x8xf32>
    %4 = tpu.matmul %1, %3, %cst {dimension_numbers = #tpu.dot_dimension_numbers<[1], [0], [0], [1], [0, 0, 1, 1], [], []>} : vector<16x32xbf16>, vector<32x8xbf16>, vector<16x8xf32> -> vector<16x8xf32>
    %c1 = arith.constant 1 : index
    %c0_5 = arith.constant 0 : index
    %c0_6 = arith.constant 0 : index
    %5 = vector.load %arg5[%c1, %c0_5, %c0_6] : memref<4x32x8xbf16, #tpu.memory_space<vmem>>, vector<1x32x8xbf16>
    %6 = vector.shape_cast %5 : vector<1x32x8xbf16> to vector<32x8xbf16>
    %cst_7 = arith.constant dense<0.000000e+00> : vector<16x8xf32>
    %7 = tpu.matmul %1, %6, %cst_7 {dimension_numbers = #tpu.dot_dimension_numbers<[1], [0], [0], [1], [0, 0, 1, 1], [], []>} : vector<16x32xbf16>, vector<32x8xbf16>, vector<16x8xf32> -> vector<16x8xf32>
    %c2 = arith.constant 2 : index
    %c0_8 = arith.constant 0 : index
    %c0_9 = arith.constant 0 : index
    %8 = vector.load %arg5[%c2, %c0_8, %c0_9] : memref<4x32x8xbf16, #tpu.memory_space<vmem>>, vector<1x32x8xbf16>
    %9 = vector.shape_cast %8 : vector<1x32x8xbf16> to vector<32x8xbf16>
    %cst_10 = arith.constant dense<0.000000e+00> : vector<16x8xf32>
    %10 = tpu.matmul %1, %9, %cst_10 {dimension_numbers = #tpu.dot_dimension_numbers<[1], [0], [0], [1], [0, 0, 1, 1], [], []>} : vector<16x32xbf16>, vector<32x8xbf16>, vector<16x8xf32> -> vector<16x8xf32>
    %c3 = arith.constant 3 : index
    %c0_11 = arith.constant 0 : index
    %c0_12 = arith.constant 0 : index
    %11 = vector.load %arg5[%c3, %c0_11, %c0_12] : memref<4x32x8xbf16, #tpu.memory_space<vmem>>, vector<1x32x8xbf16>
    %12 = vector.shape_cast %11 : vector<1x32x8xbf16> to vector<32x8xbf16>
    %cst_13 = arith.constant dense<0.000000e+00> : vector<16x8xf32>
    %13 = tpu.matmul %1, %12, %cst_13 {dimension_numbers = #tpu.dot_dimension_numbers<[1], [0], [0], [1], [0, 0, 1, 1], [], []>} : vector<16x32xbf16>, vector<32x8xbf16>, vector<16x8xf32> -> vector<16x8xf32>
    %14 = vector.shape_cast %4 : vector<16x8xf32> to vector<1x16x8xf32>
    %15 = vector.shape_cast %7 : vector<16x8xf32> to vector<1x16x8xf32>
    %16 = vector.shape_cast %10 : vector<16x8xf32> to vector<1x16x8xf32>
    %17 = vector.shape_cast %13 : vector<16x8xf32> to vector<1x16x8xf32>
    %18 = tpu.concatenate %14, %15, %16, %17 in 0 : vector<1x16x8xf32>, vector<1x16x8xf32>, vector<1x16x8xf32>, vector<1x16x8xf32> -> vector<4x16x8xf32>
    %c0_14 = arith.constant 0 : index
    %c0_15 = arith.constant 0 : index
    %c0_16 = arith.constant 0 : index
    %19 = vector.load %arg6[%c0_14, %c0_15, %c0_16] : memref<4x1x8xf32, #tpu.memory_space<vmem>>, vector<4x1x8xf32>
    %20 = vector.broadcast %19 : vector<4x1x8xf32> to vector<4x16x8xf32>
    %21 = arith.addf %18, %20 : vector<4x16x8xf32>
    %22 = arith.truncf %21 : vector<4x16x8xf32> to vector<4x16x8xbf16>
    %23 = vector.shape_cast %22 : vector<4x16x8xbf16> to vector<8x8x8xbf16>
    %c0_17 = arith.constant 0 : index
    %c0_18 = arith.constant 0 : index
    %c0_19 = arith.constant 0 : index
    %24 = vector.load %arg2[%c0_17, %c0_18, %c0_19] : memref<2x8x32xbf16, #tpu.memory_space<vmem>>, vector<2x8x32xbf16>
    %25 = vector.shape_cast %24 : vector<2x8x32xbf16> to vector<16x32xbf16>
    %c0_20 = arith.constant 0 : index
    %c0_21 = arith.constant 0 : index
    %c0_22 = arith.constant 0 : index
    %26 = vector.load %arg7[%c0_20, %c0_21, %c0_22] : memref<4x32x8xbf16, #tpu.memory_space<vmem>>, vector<1x32x8xbf16>
    %27 = vector.shape_cast %26 : vector<1x32x8xbf16> to vector<32x8xbf16>
    %cst_23 = arith.constant dense<0.000000e+00> : vector<16x8xf32>
    %28 = tpu.matmul %25, %27, %cst_23 {dimension_numbers = #tpu.dot_dimension_numbers<[1], [0], [0], [1], [0, 0, 1, 1], [], []>} : vector<16x32xbf16>, vector<32x8xbf16>, vector<16x8xf32> -> vector<16x8xf32>
    %c1_24 = arith.constant 1 : index
    %c0_25 = arith.constant 0 : index
    %c0_26 = arith.constant 0 : index
    %29 = vector.load %arg7[%c1_24, %c0_25, %c0_26] : memref<4x32x8xbf16, #tpu.memory_space<vmem>>, vector<1x32x8xbf16>
    %30 = vector.shape_cast %29 : vector<1x32x8xbf16> to vector<32x8xbf16>
    %cst_27 = arith.constant dense<0.000000e+00> : vector<16x8xf32>
    %31 = tpu.matmul %25, %30, %cst_27 {dimension_numbers = #tpu.dot_dimension_numbers<[1], [0], [0], [1], [0, 0, 1, 1], [], []>} : vector<16x32xbf16>, vector<32x8xbf16>, vector<16x8xf32> -> vector<16x8xf32>
    %c2_28 = arith.constant 2 : index
    %c0_29 = arith.constant 0 : index
    %c0_30 = arith.constant 0 : index
    %32 = vector.load %arg7[%c2_28, %c0_29, %c0_30] : memref<4x32x8xbf16, #tpu.memory_space<vmem>>, vector<1x32x8xbf16>
    %33 = vector.shape_cast %32 : vector<1x32x8xbf16> to vector<32x8xbf16>
    %cst_31 = arith.constant dense<0.000000e+00> : vector<16x8xf32>
    %34 = tpu.matmul %25, %33, %cst_31 {dimension_numbers = #tpu.dot_dimension_numbers<[1], [0], [0], [1], [0, 0, 1, 1], [], []>} : vector<16x32xbf16>, vector<32x8xbf16>, vector<16x8xf32> -> vector<16x8xf32>
    %c3_32 = arith.constant 3 : index
    %c0_33 = arith.constant 0 : index
    %c0_34 = arith.constant 0 : index
    %35 = vector.load %arg7[%c3_32, %c0_33, %c0_34] : memref<4x32x8xbf16, #tpu.memory_space<vmem>>, vector<1x32x8xbf16>
    %36 = vector.shape_cast %35 : vector<1x32x8xbf16> to vector<32x8xbf16>
    %cst_35 = arith.constant dense<0.000000e+00> : vector<16x8xf32>
    %37 = tpu.matmul %25, %36, %cst_35 {dimension_numbers = #tpu.dot_dimension_numbers<[1], [0], [0], [1], [0, 0, 1, 1], [], []>} : vector<16x32xbf16>, vector<32x8xbf16>, vector<16x8xf32> -> vector<16x8xf32>
    %38 = vector.shape_cast %28 : vector<16x8xf32> to vector<1x16x8xf32>
    %39 = vector.shape_cast %31 : vector<16x8xf32> to vector<1x16x8xf32>
    %40 = vector.shape_cast %34 : vector<16x8xf32> to vector<1x16x8xf32>
    %41 = vector.shape_cast %37 : vector<16x8xf32> to vector<1x16x8xf32>
    %42 = tpu.concatenate %38, %39, %40, %41 in 0 : vector<1x16x8xf32>, vector<1x16x8xf32>, vector<1x16x8xf32>, vector<1x16x8xf32> -> vector<4x16x8xf32>
    %c0_36 = arith.constant 0 : index
    %c0_37 = arith.constant 0 : index
    %c0_38 = arith.constant 0 : index
    %43 = vector.load %arg8[%c0_36, %c0_37, %c0_38] : memref<4x1x8xf32, #tpu.memory_space<vmem>>, vector<4x1x8xf32>
    %44 = vector.broadcast %43 : vector<4x1x8xf32> to vector<4x16x8xf32>
    %45 = arith.addf %42, %44 : vector<4x16x8xf32>
    %46 = arith.truncf %45 : vector<4x16x8xf32> to vector<4x16x8xbf16>
    %47 = vector.shape_cast %46 : vector<4x16x8xbf16> to vector<8x8x8xbf16>
    %c0_39 = arith.constant 0 : index
    %c0_40 = arith.constant 0 : index
    %c0_41 = arith.constant 0 : index
    %48 = vector.load %arg3[%c0_39, %c0_40, %c0_41] : memref<2x8x32xbf16, #tpu.memory_space<vmem>>, vector<2x8x32xbf16>
    %49 = vector.shape_cast %48 : vector<2x8x32xbf16> to vector<16x32xbf16>
    %c0_42 = arith.constant 0 : index
    %c0_43 = arith.constant 0 : index
    %c0_44 = arith.constant 0 : index
    %50 = vector.load %arg9[%c0_42, %c0_43, %c0_44] : memref<4x32x8xbf16, #tpu.memory_space<vmem>>, vector<1x32x8xbf16>
    %51 = vector.shape_cast %50 : vector<1x32x8xbf16> to vector<32x8xbf16>
    %cst_45 = arith.constant dense<0.000000e+00> : vector<16x8xf32>
    %52 = tpu.matmul %49, %51, %cst_45 {dimension_numbers = #tpu.dot_dimension_numbers<[1], [0], [0], [1], [0, 0, 1, 1], [], []>} : vector<16x32xbf16>, vector<32x8xbf16>, vector<16x8xf32> -> vector<16x8xf32>
    %c1_46 = arith.constant 1 : index
    %c0_47 = arith.constant 0 : index
    %c0_48 = arith.constant 0 : index
    %53 = vector.load %arg9[%c1_46, %c0_47, %c0_48] : memref<4x32x8xbf16, #tpu.memory_space<vmem>>, vector<1x32x8xbf16>
    %54 = vector.shape_cast %53 : vector<1x32x8xbf16> to vector<32x8xbf16>
    %cst_49 = arith.constant dense<0.000000e+00> : vector<16x8xf32>
    %55 = tpu.matmul %49, %54, %cst_49 {dimension_numbers = #tpu.dot_dimension_numbers<[1], [0], [0], [1], [0, 0, 1, 1], [], []>} : vector<16x32xbf16>, vector<32x8xbf16>, vector<16x8xf32> -> vector<16x8xf32>
    %c2_50 = arith.constant 2 : index
    %c0_51 = arith.constant 0 : index
    %c0_52 = arith.constant 0 : index
    %56 = vector.load %arg9[%c2_50, %c0_51, %c0_52] : memref<4x32x8xbf16, #tpu.memory_space<vmem>>, vector<1x32x8xbf16>
    %57 = vector.shape_cast %56 : vector<1x32x8xbf16> to vector<32x8xbf16>
    %cst_53 = arith.constant dense<0.000000e+00> : vector<16x8xf32>
    %58 = tpu.matmul %49, %57, %cst_53 {dimension_numbers = #tpu.dot_dimension_numbers<[1], [0], [0], [1], [0, 0, 1, 1], [], []>} : vector<16x32xbf16>, vector<32x8xbf16>, vector<16x8xf32> -> vector<16x8xf32>
    %c3_54 = arith.constant 3 : index
    %c0_55 = arith.constant 0 : index
    %c0_56 = arith.constant 0 : index
    %59 = vector.load %arg9[%c3_54, %c0_55, %c0_56] : memref<4x32x8xbf16, #tpu.memory_space<vmem>>, vector<1x32x8xbf16>
    %60 = vector.shape_cast %59 : vector<1x32x8xbf16> to vector<32x8xbf16>
    %cst_57 = arith.constant dense<0.000000e+00> : vector<16x8xf32>
    %61 = tpu.matmul %49, %60, %cst_57 {dimension_numbers = #tpu.dot_dimension_numbers<[1], [0], [0], [1], [0, 0, 1, 1], [], []>} : vector<16x32xbf16>, vector<32x8xbf16>, vector<16x8xf32> -> vector<16x8xf32>
    %62 = vector.shape_cast %52 : vector<16x8xf32> to vector<1x16x8xf32>
    %63 = vector.shape_cast %55 : vector<16x8xf32> to vector<1x16x8xf32>
    %64 = vector.shape_cast %58 : vector<16x8xf32> to vector<1x16x8xf32>
    %65 = vector.shape_cast %61 : vector<16x8xf32> to vector<1x16x8xf32>
    %66 = tpu.concatenate %62, %63, %64, %65 in 0 : vector<1x16x8xf32>, vector<1x16x8xf32>, vector<1x16x8xf32>, vector<1x16x8xf32> -> vector<4x16x8xf32>
    %c0_58 = arith.constant 0 : index
    %c0_59 = arith.constant 0 : index
    %c0_60 = arith.constant 0 : index
    %67 = vector.load %arg10[%c0_58, %c0_59, %c0_60] : memref<4x1x8xf32, #tpu.memory_space<vmem>>, vector<4x1x8xf32>
    %68 = vector.broadcast %67 : vector<4x1x8xf32> to vector<4x16x8xf32>
    %69 = arith.addf %66, %68 : vector<4x16x8xf32>
    %70 = arith.truncf %69 : vector<4x16x8xf32> to vector<4x16x8xbf16>
    %71 = vector.shape_cast %70 : vector<4x16x8xbf16> to vector<8x8x8xbf16>
    %c0_61 = arith.constant 0 : index
    %c0_62 = arith.constant 0 : index
    %c0_63 = arith.constant 0 : index
    %72 = vector.load %arg4[%c0_61, %c0_62, %c0_63] : memref<2x1x8xf32, #tpu.memory_space<vmem>>, vector<2x1x8xf32>
    %73 = vector.shape_cast %72 : vector<2x1x8xf32> to vector<1x2x1x8xf32>
    %74 = vector.shape_cast %73 : vector<1x2x1x8xf32> to vector<1x2x1x8xf32>
    %75 = vector.broadcast %74 : vector<1x2x1x8xf32> to vector<4x2x1x8xf32>
    %76 = vector.shape_cast %75 : vector<4x2x1x8xf32> to vector<8x1x8xf32>
    "tpu.trace_start"() <{level = 10 : i32, message = "bqd,bkd->bqk"}> : () -> ()
    %cst_64 = arith.constant dense<0.000000e+00> : vector<8x8x8xf32>
    %77 = tpu.matmul %23, %47, %cst_64 {dimension_numbers = #tpu.dot_dimension_numbers<[2], [2], [1], [1], [0, 0, 0, 1, 1, 1], [0], [0]>} : vector<8x8x8xbf16>, vector<8x8x8xbf16>, vector<8x8x8xf32> -> vector<8x8x8xf32>
    "tpu.trace_stop"() : () -> ()
    %78 = vector.broadcast %76 : vector<8x1x8xf32> to vector<8x8x8xf32>
    %79 = arith.addf %77, %78 : vector<8x8x8xf32>
    %cst_65 = arith.constant dense<0xFF800000> : vector<8x8xf32>
    %80 = vector.multi_reduction <maximumf>, %79, %cst_65 [2] : vector<8x8x8xf32> to vector<8x8xf32>
    %81 = vector.shape_cast %80 : vector<8x8xf32> to vector<8x8x1xf32>
    %82 = vector.broadcast %81 : vector<8x8x1xf32> to vector<8x8x8xf32>
    %83 = arith.subf %79, %82 : vector<8x8x8xf32>
    %84 = math.exp %83 : vector<8x8x8xf32>
    %cst_66 = arith.constant dense<0.000000e+00> : vector<8x8xf32>
    %85 = vector.multi_reduction <add>, %84, %cst_66 [2] : vector<8x8x8xf32> to vector<8x8xf32>
    %86 = vector.shape_cast %85 : vector<8x8xf32> to vector<8x8x1xf32>
    %87 = tpu.reciprocal %86 {approx = true} : vector<8x8x1xf32> -> vector<8x8x1xf32>
    %88 = vector.broadcast %87 : vector<8x8x1xf32> to vector<8x8x8xf32>
    %89 = arith.mulf %84, %88 : vector<8x8x8xf32>
    %90 = arith.truncf %89 : vector<8x8x8xf32> to vector<8x8x8xbf16>
    "tpu.trace_start"() <{level = 10 : i32, message = "bqk,bkd->bqd"}> : () -> ()
    %cst_67 = arith.constant dense<0.000000e+00> : vector<8x8x8xf32>
    %91 = tpu.matmul %90, %71, %cst_67 {dimension_numbers = #tpu.dot_dimension_numbers<[2], [1], [1], [2], [0, 0, 0, 1, 1, 2], [0], [0]>} : vector<8x8x8xbf16>, vector<8x8x8xbf16>, vector<8x8x8xf32> -> vector<8x8x8xf32>
    "tpu.trace_stop"() : () -> ()
    %92 = arith.truncf %91 : vector<8x8x8xf32> to vector<8x8x8xbf16>
    %93 = vector.shape_cast %92 : vector<8x8x8xbf16> to vector<4x16x8xbf16>
    %c0_68 = arith.constant 0 : index
    %c0_69 = arith.constant 0 : index
    %c0_70 = arith.constant 0 : index
    %94 = vector.load %arg11[%c0_68, %c0_69, %c0_70] : memref<4x8x32xbf16, #tpu.memory_space<vmem>>, vector<4x8x32xbf16>
    "tpu.trace_start"() <{level = 10 : i32, message = "hmd,hdn->hmn"}> : () -> ()
    %cst_71 = arith.constant dense<0.000000e+00> : vector<4x16x32xf32>
    %95 = tpu.matmul %93, %94, %cst_71 {dimension_numbers = #tpu.dot_dimension_numbers<[2], [1], [1], [2], [0, 0, 0, 1, 1, 2], [0], [0]>} : vector<4x16x8xbf16>, vector<4x8x32xbf16>, vector<4x16x32xf32> -> vector<4x16x32xf32>
    "tpu.trace_stop"() : () -> ()
    %cst_72 = arith.constant dense<0.000000e+00> : vector<16x32xf32>
    %96 = vector.multi_reduction <add>, %95, %cst_72 [0] : vector<4x16x32xf32> to vector<16x32xf32>
    %c0_73 = arith.constant 0 : index
    %c0_74 = arith.constant 0 : index
    %97 = vector.load %arg12[%c0_73, %c0_74] : memref<1x32xf32, #tpu.memory_space<vmem>>, vector<1x32xf32>
    %98 = vector.broadcast %97 : vector<1x32xf32> to vector<16x32xf32>
    %99 = arith.addf %96, %98 : vector<16x32xf32>
    %100 = vector.shape_cast %99 : vector<16x32xf32> to vector<2x8x32xf32>
    %c0_75 = arith.constant 0 : index
    %c0_76 = arith.constant 0 : index
    %c0_77 = arith.constant 0 : index
    %101 = vector.load %arg13[%c0_75, %c0_76, %c0_77] : memref<2x8x32xf32, #tpu.memory_space<vmem>>, vector<2x8x32xf32>
    tpu.vector_store %arg13[%c0_75, %c0_76, %c0_77], %100 {strides = array<i32>} : memref<2x8x32xf32, #tpu.memory_space<vmem>>, vector<2x8x32xf32>,
    return
  }
  func.func @transform_0(%arg0: i32) -> (i32, i32, i32) {
    %c0_i32 = arith.constant 0 : i32
    %c0_i32_0 = arith.constant 0 : i32
    %c0_i32_1 = arith.constant 0 : i32
    return %arg0, %c0_i32, %c0_i32_0 : i32, i32, i32
  }
  func.func @transform_1(%arg0: i32) -> (i32, i32, i32) {
    %c0_i32 = arith.constant 0 : i32
    %c0_i32_0 = arith.constant 0 : i32
    %c0_i32_1 = arith.constant 0 : i32
    return %arg0, %c0_i32, %c0_i32_0 : i32, i32, i32
  }
  func.func @transform_2(%arg0: i32) -> (i32, i32, i32) {
    %c0_i32 = arith.constant 0 : i32
    %c0_i32_0 = arith.constant 0 : i32
    %c0_i32_1 = arith.constant 0 : i32
    return %arg0, %c0_i32, %c0_i32_0 : i32, i32, i32
  }
  func.func @transform_3(%arg0: i32) -> (i32, i32, i32) {
    %c0_i32 = arith.constant 0 : i32
    %c0_i32_0 = arith.constant 0 : i32
    %c0_i32_1 = arith.constant 0 : i32
    return %arg0, %c0_i32, %c0_i32_0 : i32, i32, i32
  }
  func.func @transform_4(%arg0: i32) -> (i32, i32, i32) {
    %c0_i32 = arith.constant 0 : i32
    %c0_i32_0 = arith.constant 0 : i32
    %c0_i32_1 = arith.constant 0 : i32
    %c0_i32_2 = arith.constant 0 : i32
    return %c0_i32, %c0_i32_0, %c0_i32_1 : i32, i32, i32
  }
  func.func @transform_5(%arg0: i32) -> (i32, i32, i32) {
    %c0_i32 = arith.constant 0 : i32
    %c0_i32_0 = arith.constant 0 : i32
    %c0_i32_1 = arith.constant 0 : i32
    %c0_i32_2 = arith.constant 0 : i32
    return %c0_i32, %c0_i32_0, %c0_i32_1 : i32, i32, i32
  }
  func.func @transform_6(%arg0: i32) -> (i32, i32, i32) {
    %c0_i32 = arith.constant 0 : i32
    %c0_i32_0 = arith.constant 0 : i32
    %c0_i32_1 = arith.constant 0 : i32
    %c0_i32_2 = arith.constant 0 : i32
    return %c0_i32, %c0_i32_0, %c0_i32_1 : i32, i32, i32
  }
  func.func @transform_7(%arg0: i32) -> (i32, i32, i32) {
    %c0_i32 = arith.constant 0 : i32
    %c0_i32_0 = arith.constant 0 : i32
    %c0_i32_1 = arith.constant 0 : i32
    %c0_i32_2 = arith.constant 0 : i32
    return %c0_i32, %c0_i32_0, %c0_i32_1 : i32, i32, i32
  }
  func.func @transform_8(%arg0: i32) -> (i32, i32, i32) {
    %c0_i32 = arith.constant 0 : i32
    %c0_i32_0 = arith.constant 0 : i32
    %c0_i32_1 = arith.constant 0 : i32
    %c0_i32_2 = arith.constant 0 : i32
    return %c0_i32, %c0_i32_0, %c0_i32_1 : i32, i32, i32
  }
  func.func @transform_9(%arg0: i32) -> (i32, i32, i32) {
    %c0_i32 = arith.constant 0 : i32
    %c0_i32_0 = arith.constant 0 : i32
    %c0_i32_1 = arith.constant 0 : i32
    %c0_i32_2 = arith.constant 0 : i32
    return %c0_i32, %c0_i32_0, %c0_i32_1 : i32, i32, i32
  }
  func.func @transform_10(%arg0: i32) -> (i32, i32, i32) {
    %c0_i32 = arith.constant 0 : i32
    %c0_i32_0 = arith.constant 0 : i32
    %c0_i32_1 = arith.constant 0 : i32
    %c0_i32_2 = arith.constant 0 : i32
    return %c0_i32, %c0_i32_0, %c0_i32_1 : i32, i32, i32
  }
  func.func @transform_11(%arg0: i32) -> (i32, i32) {
    %c0_i32 = arith.constant 0 : i32
    %c0_i32_0 = arith.constant 0 : i32
    %c0_i32_1 = arith.constant 0 : i32
    return %c0_i32, %c0_i32_0 : i32, i32
  }
  func.func @transform_12(%arg0: i32) -> (i32, i32, i32) {
    %c0_i32 = arith.constant 0 : i32
    %c0_i32_0 = arith.constant 0 : i32
    %c0_i32_1 = arith.constant 0 : i32
    return %arg0, %c0_i32, %c0_i32_0 : i32, i32, i32
  }
}

</mosaic_0001>

<llo_original>
// kernel: tpu_custom_call.1
$region0: #{tpu_custom_call.1}
  #allocation0 [shape = 'u32[]', space=smem, size = 0x4, offset = 0x4, fixed_abs, tag = 'smem constant byte address 0x4 - core index']
  #allocation1 [shape = 'u32[144,128]{1,0:T(1,128)}', space=vmem, size = 0x12000, scoped, tag = 'internal scratch']
  %s0 = inlined_call_operand.vmem [shape: bf16[4,8,32], index: 0, kind: input, shape index: {}]
  %s1 = inlined_call_operand.vmem [shape: bf16[4,8,32], index: 1, kind: input, shape index: {}]
  %s2 = inlined_call_operand.vmem [shape: bf16[4,8,32], index: 2, kind: input, shape index: {}]
  %s3 = inlined_call_operand.vmem [shape: f32[4,1,8], index: 3, kind: input, shape index: {}]
  %s4 = inlined_call_operand.vmem [shape: bf16[4,32,8], index: 4, kind: input, shape index: {}]
  %s5 = inlined_call_operand.vmem [shape: f32[4,1,8], index: 5, kind: input, shape index: {}]
  %s6 = inlined_call_operand.vmem [shape: bf16[4,32,8], index: 6, kind: input, shape index: {}]
  %s7 = inlined_call_operand.vmem [shape: f32[4,1,8], index: 7, kind: input, shape index: {}]
  %s8 = inlined_call_operand.vmem [shape: bf16[4,32,8], index: 8, kind: input, shape index: {}]
  %s9 = inlined_call_operand.vmem [shape: f32[4,1,8], index: 9, kind: input, shape index: {}]
  %s10 = inlined_call_operand.vmem [shape: bf16[4,8,32], index: 10, kind: input, shape index: {}]
  %s11 = inlined_call_operand.vmem [shape: f32[1,32], index: 11, kind: input, shape index: {}]
  %s12 = inlined_call_operand.hbm [shape: f32[4,8,32], index: 12, kind: output, shape index: {}]
  %s13 = sld [smem:[#allocation0]]
  $region81: #{tpu_custom_call.1} parent=0
    _
  %s15 = ssub.s32 1, %s13
  %s16 = scalar_select 0, %s15, %s13
  $region1: #{tpu_custom_call.1} parent=0
    #allocation2 [shape = 'u8[16384]{0}', space=vmem, size = 0x4000, scoped, tag = 'output window, operand 0']
    #allocation3 [shape = 's32[2]{0}', space=sflag, size = 0x8, scoped, tag = 'scoped memory for tpu_custom_call.1']
    %17 = vsyncpa [#allocation3], 0
    %s18 = scalar_lea.sflag [#allocation3], 1
    %19 = vsyncpa %s18, 0
    loop: start=0, step=1, limit=4
    $region2: #{tpu_custom_call.1} parent=1 // loop_pre_header
      _
    $region3: #{tpu_custom_call.1} parent=1 // loop_header
      %s21 = sphi 0, %s25
      %p22 = scmp.ge.s32.totalorder %s21, 4
      %s31 = sphi 0, %s33
      %s34 = sphi 0, %s31
      %s35 = sphi 0, %s34
      %s51 = sphi 0, %s35
      %s57 = sphi 0, %s59
      %s60 = sphi 0, %s57
      %s61 = sphi 0, %s60
      %s77 = sphi 0, %s61
      %s83 = sphi 0, %s85
      %s86 = sphi 0, %s83
      %s87 = sphi 0, %s86
      %s103 = sphi 0, %s87
      %s109 = sphi 0, %s111
      %s112 = sphi 0, %s109
      %s113 = sphi 0, %s112
      %s129 = sphi 0, %s113
      %s133 = sphi 0, %s133
      %s135 = sphi 0, %s133
      %s136 = sphi 0, %s135
      %s150 = sphi 0, %s136
      %s154 = sphi 0, %s154
      %s156 = sphi 0, %s154
      %s157 = sphi 0, %s156
      %s171 = sphi 0, %s157
      %s175 = sphi 0, %s175
      %s177 = sphi 0, %s175
      %s178 = sphi 0, %s177
      %s192 = sphi 0, %s178
      %s196 = sphi 0, %s196
      %s198 = sphi 0, %s196
      %s199 = sphi 0, %s198
      %s213 = sphi 0, %s199
      %s217 = sphi 0, %s217
      %s219 = sphi 0, %s217
      %s220 = sphi 0, %s219
      %s234 = sphi 0, %s220
      %s238 = sphi 0, %s238
      %s240 = sphi 0, %s238
      %s241 = sphi 0, %s240
      %s255 = sphi 0, %s241
      %s259 = sphi 0, %s259
      %s261 = sphi 0, %s259
      %s262 = sphi 0, %s261
      %s276 = sphi 0, %s262
      %s280 = sphi 0, %s280
      %s282 = sphi 0, %s280
      %s283 = sphi 0, %s282
      %s297 = sphi 0, %s283
      %s303 = sphi 0, %s305
      %s306 = sphi 0, %s303
      %s307 = sphi 0, %s306
      %s323 = sphi 0, %s307
    $region4: #{tpu_custom_call.1} parent=1 // loop_header_branch
      %24 = sbr.rel (%p22) target = $region8
    $region5: #{tpu_custom_call.1} parent=1 // loop_body
      %s26 = ssub.s32 %s21, 1
      %s27 = ssub.s32 %s21, 2
      %s28 = sadd.s32 %s21, 1
      %s29 = ssub.s32 %s21, %s28
      %p30 = scmp.eq.s32.totalorder %s29, 0
      %s32 = sadd.s32 %s31, 1
      %s33 = scalar_select %p30, %s31, %s32
      %p36 = pneg %p30
      %p37 = scmp.eq.s32.totalorder %s21, 1
      %p38 = por %p36, %p37
      %p39 = scmp.ne.s32.totalorder %s31, %s34
      %p40 = scmp.eq.s32.totalorder %s21, 0
      %p41 = por %p39, %p40
      %p42 = scmp.ne.s32.totalorder %s31, %s34
      %p43 = scmp.eq.s32.totalorder %s26, 1
      %p44 = por %p42, %p43
      %p45 = scmp.ne.s32.totalorder %s34, %s35
      %p46 = scmp.eq.s32.totalorder %s26, 0
      %p47 = por %p45, %p46
      %p48 = scmp.ne.s32.totalorder %s34, %s35
      %p49 = scmp.eq.s32.totalorder %s27, 1
      %p50 = por %p48, %p49
      %p52 = scmp.ne.s32.totalorder %s35, %s51
      %p53 = scmp.eq.s32.totalorder %s27, 0
      %p54 = por %p52, %p53
      %s55 = ssub.s32 %s21, %s28
      %p56 = scmp.eq.s32.totalorder %s55, 0
      %s58 = sadd.s32 %s57, 1
      %s59 = scalar_select %p56, %s57, %s58
      %p62 = pneg %p56
      %p63 = scmp.eq.s32.totalorder %s21, 1
      %p64 = por %p62, %p63
      %p65 = scmp.ne.s32.totalorder %s57, %s60
      %p66 = scmp.eq.s32.totalorder %s21, 0
      %p67 = por %p65, %p66
      %p68 = scmp.ne.s32.totalorder %s57, %s60
      %p69 = scmp.eq.s32.totalorder %s26, 1
      %p70 = por %p68, %p69
      %p71 = scmp.ne.s32.totalorder %s60, %s61
      %p72 = scmp.eq.s32.totalorder %s26, 0
      %p73 = por %p71, %p72
      %p74 = scmp.ne.s32.totalorder %s60, %s61
      %p75 = scmp.eq.s32.totalorder %s27, 1
      %p76 = por %p74, %p75
      %p78 = scmp.ne.s32.totalorder %s61, %s77
      %p79 = scmp.eq.s32.totalorder %s27, 0
      %p80 = por %p78, %p79
      %s81 = ssub.s32 %s21, %s28
      %p82 = scmp.eq.s32.totalorder %s81, 0
      %s84 = sadd.s32 %s83, 1
      %s85 = scalar_select %p82, %s83, %s84
      %p88 = pneg %p82
      %p89 = scmp.eq.s32.totalorder %s21, 1
      %p90 = por %p88, %p89
      %p91 = scmp.ne.s32.totalorder %s83, %s86
      %p92 = scmp.eq.s32.totalorder %s21, 0
      %p93 = por %p91, %p92
      %p94 = scmp.ne.s32.totalorder %s83, %s86
      %p95 = scmp.eq.s32.totalorder %s26, 1
      %p96 = por %p94, %p95
      %p97 = scmp.ne.s32.totalorder %s86, %s87
      %p98 = scmp.eq.s32.totalorder %s26, 0
      %p99 = por %p97, %p98
      %p100 = scmp.ne.s32.totalorder %s86, %s87
      %p101 = scmp.eq.s32.totalorder %s27, 1
      %p102 = por %p100, %p101
      %p104 = scmp.ne.s32.totalorder %s87, %s103
      %p105 = scmp.eq.s32.totalorder %s27, 0
      %p106 = por %p104, %p105
      %s107 = ssub.s32 %s21, %s28
      %p108 = scmp.eq.s32.totalorder %s107, 0
      %s110 = sadd.s32 %s109, 1
      %s111 = scalar_select %p108, %s109, %s110
      %p114 = pneg %p108
      %p115 = scmp.eq.s32.totalorder %s21, 1
      %p116 = por %p114, %p115
      %p117 = scmp.ne.s32.totalorder %s109, %s112
      %p118 = scmp.eq.s32.totalorder %s21, 0
      %p119 = por %p117, %p118
      %p120 = scmp.ne.s32.totalorder %s109, %s112
      %p121 = scmp.eq.s32.totalorder %s26, 1
      %p122 = por %p120, %p121
      %p123 = scmp.ne.s32.totalorder %s112, %s113
      %p124 = scmp.eq.s32.totalorder %s26, 0
      %p125 = por %p123, %p124
      %p126 = scmp.ne.s32.totalorder %s112, %s113
      %p127 = scmp.eq.s32.totalorder %s27, 1
      %p128 = por %p126, %p127
      %p130 = scmp.ne.s32.totalorder %s113, %s129
      %p131 = scmp.eq.s32.totalorder %s27, 0
      %p132 = por %p130, %p131
      %s134 = sadd.s32 %s133, 1
      %p137 = scmp.eq.s32.totalorder %s21, 1
      %p138 = scmp.ne.s32.totalorder %s133, %s135
      %p139 = scmp.eq.s32.totalorder %s21, 0
      %p140 = por %p138, %p139
      %p141 = scmp.ne.s32.totalorder %s133, %s135
      %p142 = scmp.eq.s32.totalorder %s26, 1
      %p143 = por %p141, %p142
      %p144 = scmp.ne.s32.totalorder %s135, %s136
      %p145 = scmp.eq.s32.totalorder %s26, 0
      %p146 = por %p144, %p145
      %p147 = scmp.ne.s32.totalorder %s135, %s136
      %p148 = scmp.eq.s32.totalorder %s27, 1
      %p149 = por %p147, %p148
      %p151 = scmp.ne.s32.totalorder %s136, %s150
      %p152 = scmp.eq.s32.totalorder %s27, 0
      %p153 = por %p151, %p152
      %s155 = sadd.s32 %s154, 1
      %p158 = scmp.eq.s32.totalorder %s21, 1
      %p159 = scmp.ne.s32.totalorder %s154, %s156
      %p160 = scmp.eq.s32.totalorder %s21, 0
      %p161 = por %p159, %p160
      %p162 = scmp.ne.s32.totalorder %s154, %s156
      %p163 = scmp.eq.s32.totalorder %s26, 1
      %p164 = por %p162, %p163
      %p165 = scmp.ne.s32.totalorder %s156, %s157
      %p166 = scmp.eq.s32.totalorder %s26, 0
      %p167 = por %p165, %p166
      %p168 = scmp.ne.s32.totalorder %s156, %s157
      %p169 = scmp.eq.s32.totalorder %s27, 1
      %p170 = por %p168, %p169
      %p172 = scmp.ne.s32.totalorder %s157, %s171
      %p173 = scmp.eq.s32.totalorder %s27, 0
      %p174 = por %p172, %p173
      %s176 = sadd.s32 %s175, 1
      %p179 = scmp.eq.s32.totalorder %s21, 1
      %p180 = scmp.ne.s32.totalorder %s175, %s177
      %p181 = scmp.eq.s32.totalorder %s21, 0
      %p182 = por %p180, %p181
      %p183 = scmp.ne.s32.totalorder %s175, %s177
      %p184 = scmp.eq.s32.totalorder %s26, 1
      %p185 = por %p183, %p184
      %p186 = scmp.ne.s32.totalorder %s177, %s178
      %p187 = scmp.eq.s32.totalorder %s26, 0
      %p188 = por %p186, %p187
      %p189 = scmp.ne.s32.totalorder %s177, %s178
      %p190 = scmp.eq.s32.totalorder %s27, 1
      %p191 = por %p189, %p190
      %p193 = scmp.ne.s32.totalorder %s178, %s192
      %p194 = scmp.eq.s32.totalorder %s27, 0
      %p195 = por %p193, %p194
      %s197 = sadd.s32 %s196, 1
      %p200 = scmp.eq.s32.totalorder %s21, 1
      %p201 = scmp.ne.s32.totalorder %s196, %s198
      %p202 = scmp.eq.s32.totalorder %s21, 0
      %p203 = por %p201, %p202
      %p204 = scmp.ne.s32.totalorder %s196, %s198
      %p205 = scmp.eq.s32.totalorder %s26, 1
      %p206 = por %p204, %p205
      %p207 = scmp.ne.s32.totalorder %s198, %s199
      %p208 = scmp.eq.s32.totalorder %s26, 0
      %p209 = por %p207, %p208
      %p210 = scmp.ne.s32.totalorder %s198, %s199
      %p211 = scmp.eq.s32.totalorder %s27, 1
      %p212 = por %p210, %p211
      %p214 = scmp.ne.s32.totalorder %s199, %s213
      %p215 = scmp.eq.s32.totalorder %s27, 0
      %p216 = por %p214, %p215
      %s218 = sadd.s32 %s217, 1
      %p221 = scmp.eq.s32.totalorder %s21, 1
      %p222 = scmp.ne.s32.totalorder %s217, %s219
      %p223 = scmp.eq.s32.totalorder %s21, 0
      %p224 = por %p222, %p223
      %p225 = scmp.ne.s32.totalorder %s217, %s219
      %p226 = scmp.eq.s32.totalorder %s26, 1
      %p227 = por %p225, %p226
      %p228 = scmp.ne.s32.totalorder %s219, %s220
      %p229 = scmp.eq.s32.totalorder %s26, 0
      %p230 = por %p228, %p229
      %p231 = scmp.ne.s32.totalorder %s219, %s220
      %p232 = scmp.eq.s32.totalorder %s27, 1
      %p233 = por %p231, %p232
      %p235 = scmp.ne.s32.totalorder %s220, %s234
      %p236 = scmp.eq.s32.totalorder %s27, 0
      %p237 = por %p235, %p236
      %s239 = sadd.s32 %s238, 1
      %p242 = scmp.eq.s32.totalorder %s21, 1
      %p243 = scmp.ne.s32.totalorder %s238, %s240
      %p244 = scmp.eq.s32.totalorder %s21, 0
      %p245 = por %p243, %p244
      %p246 = scmp.ne.s32.totalorder %s238, %s240
      %p247 = scmp.eq.s32.totalorder %s26, 1
      %p248 = por %p246, %p247
      %p249 = scmp.ne.s32.totalorder %s240, %s241
      %p250 = scmp.eq.s32.totalorder %s26, 0
      %p251 = por %p249, %p250
      %p252 = scmp.ne.s32.totalorder %s240, %s241
      %p253 = scmp.eq.s32.totalorder %s27, 1
      %p254 = por %p252, %p253
      %p256 = scmp.ne.s32.totalorder %s241, %s255
      %p257 = scmp.eq.s32.totalorder %s27, 0
      %p258 = por %p256, %p257
      %s260 = sadd.s32 %s259, 1
      %p263 = scmp.eq.s32.totalorder %s21, 1
      %p264 = scmp.ne.s32.totalorder %s259, %s261
      %p265 = scmp.eq.s32.totalorder %s21, 0
      %p266 = por %p264, %p265
      %p267 = scmp.ne.s32.totalorder %s259, %s261
      %p268 = scmp.eq.s32.totalorder %s26, 1
      %p269 = por %p267, %p268
      %p270 = scmp.ne.s32.totalorder %s261, %s262
      %p271 = scmp.eq.s32.totalorder %s26, 0
      %p272 = por %p270, %p271
      %p273 = scmp.ne.s32.totalorder %s261, %s262
      %p274 = scmp.eq.s32.totalorder %s27, 1
      %p275 = por %p273, %p274
      %p277 = scmp.ne.s32.totalorder %s262, %s276
      %p278 = scmp.eq.s32.totalorder %s27, 0
      %p279 = por %p277, %p278
      %s281 = sadd.s32 %s280, 1
      %p284 = scmp.eq.s32.totalorder %s21, 1
      %p285 = scmp.ne.s32.totalorder %s280, %s282
      %p286 = scmp.eq.s32.totalorder %s21, 0
      %p287 = por %p285, %p286
      %p288 = scmp.ne.s32.totalorder %s280, %s282
      %p289 = scmp.eq.s32.totalorder %s26, 1
      %p290 = por %p288, %p289
      %p291 = scmp.ne.s32.totalorder %s282, %s283
      %p292 = scmp.eq.s32.totalorder %s26, 0
      %p293 = por %p291, %p292
      %p294 = scmp.ne.s32.totalorder %s282, %s283
      %p295 = scmp.eq.s32.totalorder %s27, 1
      %p296 = por %p294, %p295
      %p298 = scmp.ne.s32.totalorder %s283, %s297
      %p299 = scmp.eq.s32.totalorder %s27, 0
      %p300 = por %p298, %p299
      %s301 = ssub.s32 %s21, %s28
      %p302 = scmp.eq.s32.totalorder %s301, 0
      %s304 = sadd.s32 %s303, 1
      %s305 = scalar_select %p302, %s303, %s304
      %p308 = pneg %p302
      %p309 = scmp.eq.s32.totalorder %s21, 1
      %p310 = por %p308, %p309
      %p311 = scmp.ne.s32.totalorder %s303, %s306
      %p312 = scmp.eq.s32.totalorder %s21, 0
      %p313 = por %p311, %p312
      %p314 = scmp.ne.s32.totalorder %s303, %s306
      %p315 = scmp.eq.s32.totalorder %s26, 1
      %p316 = por %p314, %p315
      %p317 = scmp.ne.s32.totalorder %s306, %s307
      %p318 = scmp.eq.s32.totalorder %s26, 0
      %p319 = por %p317, %p318
      %p320 = scmp.ne.s32.totalorder %s306, %s307
      %p321 = scmp.eq.s32.totalorder %s27, 1
      %p322 = por %p320, %p321
      %p324 = scmp.ne.s32.totalorder %s307, %s323
      %p325 = scmp.eq.s32.totalorder %s27, 0
      %p326 = por %p324, %p325
      %p327 = scmp.le.s32.totalorder 1, %s21
      %p328 = scmp.lt.s32.totalorder %s21, 3
      %p329 = pnand %p327, %p328
      %p330 = pneg %p329
      // Predicated region
      $region9: #{tpu_custom_call.1} parent=5 // pred_check
        _
      $region10: #{tpu_custom_call.1} parent=5 // pred_check_branch
        %332 = sbr.rel (%p329) target = $region12
      $region11: #{tpu_custom_call.1} parent=5 // pred_region
        %s333 = ssub.s32 %s21, 1
        // Predicated region
        $region13: #{tpu_custom_call.1} parent=11 // pred_check
          %p334 = pneg %p146
        $region14: #{tpu_custom_call.1} parent=11 // pred_check_branch
          %336 = sbr.rel (%p334) target = $region16
        $region15: #{tpu_custom_call.1} parent=11 // pred_region
          _
        $region16: #{tpu_custom_call.1} parent=11 // pred_fallthru
          _
        // Predicated region
        $region17: #{tpu_custom_call.1} parent=11 // pred_check
          %p337 = pneg %p167
        $region18: #{tpu_custom_call.1} parent=11 // pred_check_branch
          %339 = sbr.rel (%p337) target = $region20
        $region19: #{tpu_custom_call.1} parent=11 // pred_region
          _
        $region20: #{tpu_custom_call.1} parent=11 // pred_fallthru
          _
        // Predicated region
        $region21: #{tpu_custom_call.1} parent=11 // pred_check
          %p340 = pneg %p188
        $region22: #{tpu_custom_call.1} parent=11 // pred_check_branch
          %342 = sbr.rel (%p340) target = $region24
        $region23: #{tpu_custom_call.1} parent=11 // pred_region
          _
        $region24: #{tpu_custom_call.1} parent=11 // pred_fallthru
          _
        // Predicated region
        $region25: #{tpu_custom_call.1} parent=11 // pred_check
          %p343 = pneg %p209
        $region26: #{tpu_custom_call.1} parent=11 // pred_check_branch
          %345 = sbr.rel (%p343) target = $region28
        $region27: #{tpu_custom_call.1} parent=11 // pred_region
          _
        $region28: #{tpu_custom_call.1} parent=11 // pred_fallthru
          _
        // Predicated region
        $region29: #{tpu_custom_call.1} parent=11 // pred_check
          %p346 = pneg %p230
        $region30: #{tpu_custom_call.1} parent=11 // pred_check_branch
          %348 = sbr.rel (%p346) target = $region32
        $region31: #{tpu_custom_call.1} parent=11 // pred_region
          _
        $region32: #{tpu_custom_call.1} parent=11 // pred_fallthru
          _
        // Predicated region
        $region33: #{tpu_custom_call.1} parent=11 // pred_check
          %p349 = pneg %p251
        $region34: #{tpu_custom_call.1} parent=11 // pred_check_branch
          %351 = sbr.rel (%p349) target = $region36
        $region35: #{tpu_custom_call.1} parent=11 // pred_region
          _
        $region36: #{tpu_custom_call.1} parent=11 // pred_fallthru
          _
        // Predicated region
        $region37: #{tpu_custom_call.1} parent=11 // pred_check
          %p352 = pneg %p272
        $region38: #{tpu_custom_call.1} parent=11 // pred_check_branch
          %354 = sbr.rel (%p352) target = $region40
        $region39: #{tpu_custom_call.1} parent=11 // pred_region
          _
        $region40: #{tpu_custom_call.1} parent=11 // pred_fallthru
          _
        // Predicated region
        $region41: #{tpu_custom_call.1} parent=11 // pred_check
          %p355 = pneg %p293
        $region42: #{tpu_custom_call.1} parent=11 // pred_check_branch
          %357 = sbr.rel (%p355) target = $region44
        $region43: #{tpu_custom_call.1} parent=11 // pred_region
          _
        $region44: #{tpu_custom_call.1} parent=11 // pred_fallthru
          _
      $region12: #{tpu_custom_call.1} parent=5 // pred_fallthru
        _
      %p358 = scmp.lt.s32.totalorder %s21, 2
      // Predicated region
      $region45: #{tpu_custom_call.1} parent=5 // pred_check
        %p359 = pneg %p358
      $region46: #{tpu_custom_call.1} parent=5 // pred_check_branch
        %361 = sbr.rel (%p359) target = $region48
      $region47: #{tpu_custom_call.1} parent=5 // pred_region
        // Predicated region
        $region49: #{tpu_custom_call.1} parent=47 // pred_check
          %p362 = pneg %p41
        $region50: #{tpu_custom_call.1} parent=47 // pred_check_branch
          %364 = sbr.rel (%p362) target = $region52
        $region51: #{tpu_custom_call.1} parent=47 // pred_region
          %s365 = smul.u32 2, %s21
          %p366 = scmp.lt.s32.totalorder %s365, 3
          %s367 = scalar_select %p366, %s365, 3
          %s368 = smul.addr %s367, 4
          %s369 = scalar_lea.vmem %s0, %s368
          %s370 = smul.u32 2, %s21
        $region52: #{tpu_custom_call.1} parent=47 // pred_fallthru
          _
        // Predicated region
        $region53: #{tpu_custom_call.1} parent=47 // pred_check
          %p371 = pneg %p67
        $region54: #{tpu_custom_call.1} parent=47 // pred_check_branch
          %373 = sbr.rel (%p371) target = $region56
        $region55: #{tpu_custom_call.1} parent=47 // pred_region
          %s374 = smul.u32 2, %s21
          %p375 = scmp.lt.s32.totalorder %s374, 3
          %s376 = scalar_select %p375, %s374, 3
          %s377 = smul.addr %s376, 4
          %s378 = scalar_lea.vmem %s1, %s377
          %s379 = smul.u32 2, %s21
        $region56: #{tpu_custom_call.1} parent=47 // pred_fallthru
          _
        // Predicated region
        $region57: #{tpu_custom_call.1} parent=47 // pred_check
          %p380 = pneg %p93
        $region58: #{tpu_custom_call.1} parent=47 // pred_check_branch
          %382 = sbr.rel (%p380) target = $region60
        $region59: #{tpu_custom_call.1} parent=47 // pred_region
          %s383 = smul.u32 2, %s21
          %p384 = scmp.lt.s32.totalorder %s383, 3
          %s385 = scalar_select %p384, %s383, 3
          %s386 = smul.addr %s385, 4
          %s387 = scalar_lea.vmem %s2, %s386
          %s388 = smul.u32 2, %s21
        $region60: #{tpu_custom_call.1} parent=47 // pred_fallthru
          _
        // Predicated region
        $region61: #{tpu_custom_call.1} parent=47 // pred_check
          %p389 = pneg %p119
        $region62: #{tpu_custom_call.1} parent=47 // pred_check_branch
          %391 = sbr.rel (%p389) target = $region64
        $region63: #{tpu_custom_call.1} parent=47 // pred_region
          %s392 = smul.u32 2, %s21
          %p393 = scmp.lt.s32.totalorder %s392, 3
          %s394 = scalar_select %p393, %s392, 3
          %s395 = scalar_lea.vmem %s3, %s394
          %s396 = smul.u32 2, %s21
        $region64: #{tpu_custom_call.1} parent=47 // pred_fallthru
          _
      $region48: #{tpu_custom_call.1} parent=5 // pred_fallthru
        _
      %p397 = scmp.le.s32.totalorder 1, %s21
      %p398 = scmp.lt.s32.totalorder %s21, 3
      %p399 = pnand %p397, %p398
      %p400 = pneg %p399
      // Predicated region
      $region65: #{tpu_custom_call.1} parent=5 // pred_check
        _
      $region66: #{tpu_custom_call.1} parent=5 // pred_check_branch
        %402 = sbr.rel (%p399) target = $region68
      $region67: #{tpu_custom_call.1} parent=5 // pred_region
        %s403 = ssub.s32 %s21, 1
        %s404 = smul.u32 2, %s26
        %p405 = scmp.lt.s32.totalorder %s404, 3
        %s406 = scalar_select %p405, %s404, 3
        %s407 = smul.addr %s406, 4
        %s408 = scalar_lea.vmem %s0, %s407
        %p409 = pneg %p47
        %p410 = pneg %p44
        %s411 = smul.u32 2, %s26
        %p412 = scmp.lt.s32.totalorder %s411, 3
        %s413 = scalar_select %p412, %s411, 3
        %s414 = smul.addr %s413, 4
        %s415 = scalar_lea.vmem %s1, %s414
        %p416 = pneg %p73
        %p417 = pneg %p70
        %s418 = smul.u32 2, %s26
        %p419 = scmp.lt.s32.totalorder %s418, 3
        %s420 = scalar_select %p419, %s418, 3
        %s421 = smul.addr %s420, 4
        %s422 = scalar_lea.vmem %s2, %s421
        %p423 = pneg %p99
        %p424 = pneg %p96
        %s425 = smul.u32 2, %s26
        %p426 = scmp.lt.s32.totalorder %s425, 3
        %s427 = scalar_select %p426, %s425, 3
        %s428 = scalar_lea.vmem %s3, %s427
        %p429 = pneg %p125
        %p430 = pneg %p122
        %p431 = pneg %p146
        %p432 = pneg %p143
        %p433 = pneg %p167
        %p434 = pneg %p164
        %p435 = pneg %p188
        %p436 = pneg %p185
        %p437 = pneg %p209
        %p438 = pneg %p206
        %p439 = pneg %p230
        %p440 = pneg %p227
        %p441 = pneg %p251
        %p442 = pneg %p248
        %p443 = pneg %p272
        %p444 = pneg %p269
        %p445 = pneg %p293
        %p446 = pneg %p290
        %p447 = pneg %p319
        %p448 = pneg %p316
        %s449 = sand.u32 %s306, 1
        %s450 = scalar_lea.sflag [#allocation3], %s449
        %s451 = sand.u32 %s306, 1
        %s452 = smul.addr %s451, 16
        %s453 = scalar_lea.vmem [#allocation2], %s452
        %s454 = smul.u32 2, %s26
        %p455 = scmp.lt.s32.totalorder %s454, 3
        %s456 = scalar_select %p455, %s454, 3
        %s457 = smul.addr %s456, 4
        %s458 = scalar_lea.vmem %s0, %s457
        %s459 = smul.u32 2, %s26
        %s460 = smul.u32 2, %s26
        %p461 = scmp.lt.s32.totalorder %s460, 3
        %s462 = scalar_select %p461, %s460, 3
        %s463 = smul.addr %s462, 4
        %s464 = scalar_lea.vmem %s1, %s463
        %s465 = smul.u32 2, %s26
        %s466 = smul.u32 2, %s26
        %p467 = scmp.lt.s32.totalorder %s466, 3
        %s468 = scalar_select %p467, %s466, 3
        %s469 = smul.addr %s468, 4
        %s470 = scalar_lea.vmem %s2, %s469
        %s471 = smul.u32 2, %s26
        %s472 = smul.u32 2, %s26
        %p473 = scmp.lt.s32.totalorder %s472, 3
        %s474 = scalar_select %p473, %s472, 3
        %s475 = scalar_lea.vmem %s3, %s474
        %s476 = smul.u32 2, %s26
        %s477 = smul.u32 2, %s26
        %v479 = vld [vmem:[%s458] sm:$0xf]
        %v480 = vld [vmem:[%s458 + $0x4] sm:$0xf]
        %v481 = vld [vmem:[%s4] sm:$0xf]
        %v482 = vld [vmem:[%s4 + $0x4] sm:$0xf]
        %v483 = vld [vmem:[%s4 + $0x8] sm:$0xf]
        %v484 = vld [vmem:[%s4 + $0xc] sm:$0xf]
        %v487 = vunpack.c.l.b16 %v479
        %v488 = vunpack.c.l.b16 %v480
        %v489 = vpack.c.b16 %v488, %v487
        %v494 = vunpack.c.l.b16 %v481
        %v495 = vunpack.c.l.b16 %v482
        %v496 = vunpack.c.l.b16 %v483
        %v497 = vunpack.c.l.b16 %v484
        %v498 = vpack.c.b16 %v495, %v494
        %v499 = vpack.c.b16 %v497, %v496
        %vm502 = vcmask 261120
        %v504 = vsel %vm502, %v489, 0
        %506 = vmatprep.subr.bf16.mxu0 0
        %507 = vmatpush1.bf16.msra.mxu0 %v498
        %508 = vmatprep.subr.bf16.mxu0 0
        %509 = vmatpush1.bf16.msra.mxu0 %v499
        %510 = vmatprep.subr.bf16.mxu0 0
        %511 = vmatpush1.bf16.msra.mxu0 0
        %512 = vmatprep.subr.bf16.mxu0 0
        %513 = vmatpush1.bf16.msra.mxu0 0
        %514 = vmatprep.subr.bf16.mxu0 0
        %515 = vmatpush1.bf16.msra.mxu0 0
        %516 = vmatprep.subr.bf16.mxu0 0
        %517 = vmatpush1.bf16.msra.mxu0 0
        %518 = vmatprep.subr.bf16.mxu0 0
        %519 = vmatpush1.bf16.msra.mxu0 0
        %520 = vmatprep.subr.bf16.mxu0 0
        %521 = vmatpush1.bf16.msra.mxu0 0
        %522 = vmatprep.subr.bf16.mxu0 0
        %523 = vmatpush1.bf16.msra.mxu0 0
        %524 = vmatprep.subr.bf16.mxu0 0
        %525 = vmatpush1.bf16.msra.mxu0 0
        %526 = vmatprep.subr.bf16.mxu0 0
        %527 = vmatpush1.bf16.msra.mxu0 0
        %528 = vmatprep.subr.bf16.mxu0 0
        %529 = vmatpush1.bf16.msra.mxu0 0
        %530 = vmatprep.subr.bf16.mxu0 0
        %531 = vmatpush1.bf16.msra.mxu0 0
        %532 = vmatprep.subr.bf16.mxu0 0
        %533 = vmatpush1.bf16.msra.mxu0 0
        %534 = vmatprep.subr.bf16.mxu0 0
        %535 = vmatpush1.bf16.msra.mxu0 0
        %536 = vmatprep.subr.bf16.mxu0 0
        %537 = vmatpush1.bf16.msra.mxu0 0
        %538 = vmatprep.mubr.bf16.mxu0 0
        %539 = vmatmul.mubr.bf16.gmra.mrb[0].mxu0 %v504
        %v540 = vpop.f32.mrb[0].mxu0
        %v541 = vadd.f32 0.0, %v540
        %v542 = vpop.f32.mrb[0].mxu0
        %v543 = vpop.f32.mrb[0].mxu0
        %v544 = vadd.f32 0.0, %v543
        %v545 = vpop.f32.mrb[0].mxu0
        %546 = vdwg.mxu0
        %s547 = scalar_lea.vmem %s4, 16
        %v548 = vld [vmem:[%s547] sm:$0xf]
        %v549 = vld [vmem:[%s547 + $0x4] sm:$0xf]
        %v550 = vld [vmem:[%s547 + $0x8] sm:$0xf]
        %v551 = vld [vmem:[%s547 + $0xc] sm:$0xf]
        %v556 = vunpack.c.l.b16 %v548
        %v557 = vunpack.c.l.b16 %v549
        %v558 = vunpack.c.l.b16 %v550
        %v559 = vunpack.c.l.b16 %v551
        %v560 = vpack.c.b16 %v557, %v556
        %v561 = vpack.c.b16 %v559, %v558
        %564 = vmatprep.subr.bf16.mxu0 0
        %565 = vmatpush1.bf16.msra.mxu0 %v560
        %566 = vmatprep.subr.bf16.mxu0 0
        %567 = vmatpush1.bf16.msra.mxu0 %v561
        %568 = vmatprep.subr.bf16.mxu0 0
        %569 = vmatpush1.bf16.msra.mxu0 0
        %570 = vmatprep.subr.bf16.mxu0 0
        %571 = vmatpush1.bf16.msra.mxu0 0
        %572 = vmatprep.subr.bf16.mxu0 0
        %573 = vmatpush1.bf16.msra.mxu0 0
        %574 = vmatprep.subr.bf16.mxu0 0
        %575 = vmatpush1.bf16.msra.mxu0 0
        %576 = vmatprep.subr.bf16.mxu0 0
        %577 = vmatpush1.bf16.msra.mxu0 0
        %578 = vmatprep.subr.bf16.mxu0 0
        %579 = vmatpush1.bf16.msra.mxu0 0
        %580 = vmatprep.subr.bf16.mxu0 0
        %581 = vmatpush1.bf16.msra.mxu0 0
        %582 = vmatprep.subr.bf16.mxu0 0
        %583 = vmatpush1.bf16.msra.mxu0 0
        %584 = vmatprep.subr.bf16.mxu0 0
        %585 = vmatpush1.bf16.msra.mxu0 0
        %586 = vmatprep.subr.bf16.mxu0 0
        %587 = vmatpush1.bf16.msra.mxu0 0
        %588 = vmatprep.subr.bf16.mxu0 0
        %589 = vmatpush1.bf16.msra.mxu0 0
        %590 = vmatprep.subr.bf16.mxu0 0
        %591 = vmatpush1.bf16.msra.mxu0 0
        %592 = vmatprep.subr.bf16.mxu0 0
        %593 = vmatpush1.bf16.msra.mxu0 0
        %594 = vmatprep.subr.bf16.mxu0 0
        %595 = vmatpush1.bf16.msra.mxu0 0
        %596 = vmatprep.mubr.bf16.mxu0 0
        %597 = vmatmul.mubr.bf16.gmra.mrb[0].mxu0 %v504
        %v598 = vpop.f32.mrb[0].mxu0
        %v599 = vadd.f32 0.0, %v598
        %v600 = vpop.f32.mrb[0].mxu0
        %v601 = vpop.f32.mrb[0].mxu0
        %v602 = vadd.f32 0.0, %v601
        %v603 = vpop.f32.mrb[0].mxu0
        %604 = vdwg.mxu0
        %s605 = scalar_lea.vmem %s4, 32
        %v606 = vld [vmem:[%s605] sm:$0xf]
        %v607 = vld [vmem:[%s605 + $0x4] sm:$0xf]
        %v608 = vld [vmem:[%s605 + $0x8] sm:$0xf]
        %v609 = vld [vmem:[%s605 + $0xc] sm:$0xf]
        %v614 = vunpack.c.l.b16 %v606
        %v615 = vunpack.c.l.b16 %v607
        %v616 = vunpack.c.l.b16 %v608
        %v617 = vunpack.c.l.b16 %v609
        %v618 = vpack.c.b16 %v615, %v614
        %v619 = vpack.c.b16 %v617, %v616
        %622 = vmatprep.subr.bf16.mxu0 0
        %623 = vmatpush1.bf16.msra.mxu0 %v618
        %624 = vmatprep.subr.bf16.mxu0 0
        %625 = vmatpush1.bf16.msra.mxu0 %v619
        %626 = vmatprep.subr.bf16.mxu0 0
        %627 = vmatpush1.bf16.msra.mxu0 0
        %628 = vmatprep.subr.bf16.mxu0 0
        %629 = vmatpush1.bf16.msra.mxu0 0
        %630 = vmatprep.subr.bf16.mxu0 0
        %631 = vmatpush1.bf16.msra.mxu0 0
        %632 = vmatprep.subr.bf16.mxu0 0
        %633 = vmatpush1.bf16.msra.mxu0 0
        %634 = vmatprep.subr.bf16.mxu0 0
        %635 = vmatpush1.bf16.msra.mxu0 0
        %636 = vmatprep.subr.bf16.mxu0 0
        %637 = vmatpush1.bf16.msra.mxu0 0
        %638 = vmatprep.subr.bf16.mxu0 0
        %639 = vmatpush1.bf16.msra.mxu0 0
        %640 = vmatprep.subr.bf16.mxu0 0
        %641 = vmatpush1.bf16.msra.mxu0 0
        %642 = vmatprep.subr.bf16.mxu0 0
        %643 = vmatpush1.bf16.msra.mxu0 0
        %644 = vmatprep.subr.bf16.mxu0 0
        %645 = vmatpush1.bf16.msra.mxu0 0
        %646 = vmatprep.subr.bf16.mxu0 0
        %647 = vmatpush1.bf16.msra.mxu0 0
        %648 = vmatprep.subr.bf16.mxu0 0
        %649 = vmatpush1.bf16.msra.mxu0 0
        %650 = vmatprep.subr.bf16.mxu0 0
        %651 = vmatpush1.bf16.msra.mxu0 0
        %652 = vmatprep.subr.bf16.mxu0 0
        %653 = vmatpush1.bf16.msra.mxu0 0
        %654 = vmatprep.mubr.bf16.mxu0 0
        %655 = vmatmul.mubr.bf16.gmra.mrb[0].mxu0 %v504
        %v656 = vpop.f32.mrb[0].mxu0
        %v657 = vadd.f32 0.0, %v656
        %v658 = vpop.f32.mrb[0].mxu0
        %v659 = vpop.f32.mrb[0].mxu0
        %v660 = vadd.f32 0.0, %v659
        %v661 = vpop.f32.mrb[0].mxu0
        %662 = vdwg.mxu0
        %s663 = scalar_lea.vmem %s4, 48
        %v664 = vld [vmem:[%s663] sm:$0xf]
        %v665 = vld [vmem:[%s663 + $0x4] sm:$0xf]
        %v666 = vld [vmem:[%s663 + $0x8] sm:$0xf]
        %v667 = vld [vmem:[%s663 + $0xc] sm:$0xf]
        %v672 = vunpack.c.l.b16 %v664
        %v673 = vunpack.c.l.b16 %v665
        %v674 = vunpack.c.l.b16 %v666
        %v675 = vunpack.c.l.b16 %v667
        %v676 = vpack.c.b16 %v673, %v672
        %v677 = vpack.c.b16 %v675, %v674
        %680 = vmatprep.subr.bf16.mxu0 0
        %681 = vmatpush1.bf16.msra.mxu0 %v676
        %682 = vmatprep.subr.bf16.mxu0 0
        %683 = vmatpush1.bf16.msra.mxu0 %v677
        %684 = vmatprep.subr.bf16.mxu0 0
        %685 = vmatpush1.bf16.msra.mxu0 0
        %686 = vmatprep.subr.bf16.mxu0 0
        %687 = vmatpush1.bf16.msra.mxu0 0
        %688 = vmatprep.subr.bf16.mxu0 0
        %689 = vmatpush1.bf16.msra.mxu0 0
        %690 = vmatprep.subr.bf16.mxu0 0
        %691 = vmatpush1.bf16.msra.mxu0 0
        %692 = vmatprep.subr.bf16.mxu0 0
        %693 = vmatpush1.bf16.msra.mxu0 0
        %694 = vmatprep.subr.bf16.mxu0 0
        %695 = vmatpush1.bf16.msra.mxu0 0
        %696 = vmatprep.subr.bf16.mxu0 0
        %697 = vmatpush1.bf16.msra.mxu0 0
        %698 = vmatprep.subr.bf16.mxu0 0
        %699 = vmatpush1.bf16.msra.mxu0 0
        %700 = vmatprep.subr.bf16.mxu0 0
        %701 = vmatpush1.bf16.msra.mxu0 0
        %702 = vmatprep.subr.bf16.mxu0 0
        %703 = vmatpush1.bf16.msra.mxu0 0
        %704 = vmatprep.subr.bf16.mxu0 0
        %705 = vmatpush1.bf16.msra.mxu0 0
        %706 = vmatprep.subr.bf16.mxu0 0
        %707 = vmatpush1.bf16.msra.mxu0 0
        %708 = vmatprep.subr.bf16.mxu0 0
        %709 = vmatpush1.bf16.msra.mxu0 0
        %710 = vmatprep.subr.bf16.mxu0 0
        %711 = vmatpush1.bf16.msra.mxu0 0
        %712 = vmatprep.mubr.bf16.mxu0 0
        %713 = vmatmul.mubr.bf16.gmra.mrb[0].mxu0 %v504
        %v714 = vpop.f32.mrb[0].mxu0
        %v715 = vadd.f32 0.0, %v714
        %v716 = vpop.f32.mrb[0].mxu0
        %v717 = vpop.f32.mrb[0].mxu0
        %v718 = vadd.f32 0.0, %v717
        %v719 = vpop.f32.mrb[0].mxu0
        %720 = vdwg.mxu0
        %v721 = vld [vmem:[%s5] sm:$0x1]
        %v722 = vld [vmem:[%s5 + $0x1] sm:$0x1]
        %v723 = vld [vmem:[%s5 + $0x2] sm:$0x1]
        %v724 = vld [vmem:[%s5 + $0x3] sm:$0x1]
        %v729 = vlaneseq
        %v730 = vshrl.u32 %v729, 7
        %v731 = vsub.s32 0, %v730
        %v732 = vrot.slane %v721, %v731
        %v733 = vlaneseq
        %v734 = vshrl.u32 %v733, 7
        %v735 = vsub.s32 0, %v734
        %v736 = vrot.slane %v722, %v735
        %v737 = vlaneseq
        %v738 = vshrl.u32 %v737, 7
        %v739 = vsub.s32 0, %v738
        %v740 = vrot.slane %v723, %v739
        %v741 = vlaneseq
        %v742 = vshrl.u32 %v741, 7
        %v743 = vsub.s32 0, %v742
        %v744 = vrot.slane %v724, %v743
        %v749 = vadd.f32 %v541, %v732
        %v750 = vadd.f32 %v544, %v732
        %v751 = vadd.f32 %v599, %v736
        %v752 = vadd.f32 %v602, %v736
        %v753 = vadd.f32 %v657, %v740
        %v754 = vadd.f32 %v660, %v740
        %v755 = vadd.f32 %v715, %v744
        %v756 = vadd.f32 %v718, %v744
        %v757 = vpack.c.bf16 %v750, %v749
        %v758 = vpack.c.bf16 %v752, %v751
        %v759 = vpack.c.bf16 %v754, %v753
        %v760 = vpack.c.bf16 %v756, %v755
        %v765 = vunpack.c.l.b16 %v757
        %v766 = vunpack.c.h.b16 %v757
        %v767 = vunpack.c.l.b16 %v758
        %v768 = vunpack.c.h.b16 %v758
        %v769 = vunpack.c.l.b16 %v759
        %v770 = vunpack.c.h.b16 %v759
        %v771 = vunpack.c.l.b16 %v760
        %v772 = vunpack.c.h.b16 %v760
        %v773 = vpack.c.b16 %v765, %v765
        %v774 = vpack.c.b16 %v766, %v766
        %v775 = vpack.c.b16 %v767, %v767
        %v776 = vpack.c.b16 %v768, %v768
        %v777 = vpack.c.b16 %v769, %v769
        %v778 = vpack.c.b16 %v770, %v770
        %v779 = vpack.c.b16 %v771, %v771
        %v780 = vpack.c.b16 %v772, %v772
        %v781 = vld [vmem:[%s464] sm:$0xf]
        %v782 = vld [vmem:[%s464 + $0x4] sm:$0xf]
        %v783 = vld [vmem:[%s6] sm:$0xf]
        %v784 = vld [vmem:[%s6 + $0x4] sm:$0xf]
        %v785 = vld [vmem:[%s6 + $0x8] sm:$0xf]
        %v786 = vld [vmem:[%s6 + $0xc] sm:$0xf]
        %v789 = vunpack.c.l.b16 %v781
        %v790 = vunpack.c.l.b16 %v782
        %v791 = vpack.c.b16 %v790, %v789
        %v796 = vunpack.c.l.b16 %v783
        %v797 = vunpack.c.l.b16 %v784
        %v798 = vunpack.c.l.b16 %v785
        %v799 = vunpack.c.l.b16 %v786
        %v800 = vpack.c.b16 %v797, %v796
        %v801 = vpack.c.b16 %v799, %v798
        %v805 = vsel %vm502, %v791, 0
        %807 = vmatprep.subr.bf16.mxu0 0
        %808 = vmatpush1.bf16.msra.mxu0 %v800
        %809 = vmatprep.subr.bf16.mxu0 0
        %810 = vmatpush1.bf16.msra.mxu0 %v801
        %811 = vmatprep.subr.bf16.mxu0 0
        %812 = vmatpush1.bf16.msra.mxu0 0
        %813 = vmatprep.subr.bf16.mxu0 0
        %814 = vmatpush1.bf16.msra.mxu0 0
        %815 = vmatprep.subr.bf16.mxu0 0
        %816 = vmatpush1.bf16.msra.mxu0 0
        %817 = vmatprep.subr.bf16.mxu0 0
        %818 = vmatpush1.bf16.msra.mxu0 0
        %819 = vmatprep.subr.bf16.mxu0 0
        %820 = vmatpush1.bf16.msra.mxu0 0
        %821 = vmatprep.subr.bf16.mxu0 0
        %822 = vmatpush1.bf16.msra.mxu0 0
        %823 = vmatprep.subr.bf16.mxu0 0
        %824 = vmatpush1.bf16.msra.mxu0 0
        %825 = vmatprep.subr.bf16.mxu0 0
        %826 = vmatpush1.bf16.msra.mxu0 0
        %827 = vmatprep.subr.bf16.mxu0 0
        %828 = vmatpush1.bf16.msra.mxu0 0
        %829 = vmatprep.subr.bf16.mxu0 0
        %830 = vmatpush1.bf16.msra.mxu0 0
        %831 = vmatprep.subr.bf16.mxu0 0
        %832 = vmatpush1.bf16.msra.mxu0 0
        %833 = vmatprep.subr.bf16.mxu0 0
        %834 = vmatpush1.bf16.msra.mxu0 0
        %835 = vmatprep.subr.bf16.mxu0 0
        %836 = vmatpush1.bf16.msra.mxu0 0
        %837 = vmatprep.subr.bf16.mxu0 0
        %838 = vmatpush1.bf16.msra.mxu0 0
        %839 = vmatprep.mubr.bf16.mxu0 0
        %840 = vmatmul.mubr.bf16.gmra.mrb[0].mxu0 %v805
        %v841 = vpop.f32.mrb[0].mxu0
        %v842 = vadd.f32 0.0, %v841
        %v843 = vpop.f32.mrb[0].mxu0
        %v844 = vpop.f32.mrb[0].mxu0
        %v845 = vadd.f32 0.0, %v844
        %v846 = vpop.f32.mrb[0].mxu0
        %847 = vdwg.mxu0
        %s848 = scalar_lea.vmem %s6, 16
        %v849 = vld [vmem:[%s848] sm:$0xf]
        %v850 = vld [vmem:[%s848 + $0x4] sm:$0xf]
        %v851 = vld [vmem:[%s848 + $0x8] sm:$0xf]
        %v852 = vld [vmem:[%s848 + $0xc] sm:$0xf]
        %v857 = vunpack.c.l.b16 %v849
        %v858 = vunpack.c.l.b16 %v850
        %v859 = vunpack.c.l.b16 %v851
        %v860 = vunpack.c.l.b16 %v852
        %v861 = vpack.c.b16 %v858, %v857
        %v862 = vpack.c.b16 %v860, %v859
        %865 = vmatprep.subr.bf16.mxu0 0
        %866 = vmatpush1.bf16.msra.mxu0 %v861
        %867 = vmatprep.subr.bf16.mxu0 0
        %868 = vmatpush1.bf16.msra.mxu0 %v862
        %869 = vmatprep.subr.bf16.mxu0 0
        %870 = vmatpush1.bf16.msra.mxu0 0
        %871 = vmatprep.subr.bf16.mxu0 0
        %872 = vmatpush1.bf16.msra.mxu0 0
        %873 = vmatprep.subr.bf16.mxu0 0
        %874 = vmatpush1.bf16.msra.mxu0 0
        %875 = vmatprep.subr.bf16.mxu0 0
        %876 = vmatpush1.bf16.msra.mxu0 0
        %877 = vmatprep.subr.bf16.mxu0 0
        %878 = vmatpush1.bf16.msra.mxu0 0
        %879 = vmatprep.subr.bf16.mxu0 0
        %880 = vmatpush1.bf16.msra.mxu0 0
        %881 = vmatprep.subr.bf16.mxu0 0
        %882 = vmatpush1.bf16.msra.mxu0 0
        %883 = vmatprep.subr.bf16.mxu0 0
        %884 = vmatpush1.bf16.msra.mxu0 0
        %885 = vmatprep.subr.bf16.mxu0 0
        %886 = vmatpush1.bf16.msra.mxu0 0
        %887 = vmatprep.subr.bf16.mxu0 0
        %888 = vmatpush1.bf16.msra.mxu0 0
        %889 = vmatprep.subr.bf16.mxu0 0
        %890 = vmatpush1.bf16.msra.mxu0 0
        %891 = vmatprep.subr.bf16.mxu0 0
        %892 = vmatpush1.bf16.msra.mxu0 0
        %893 = vmatprep.subr.bf16.mxu0 0
        %894 = vmatpush1.bf16.msra.mxu0 0
        %895 = vmatprep.subr.bf16.mxu0 0
        %896 = vmatpush1.bf16.msra.mxu0 0
        %897 = vmatprep.mubr.bf16.mxu0 0
        %898 = vmatmul.mubr.bf16.gmra.mrb[0].mxu0 %v805
        %v899 = vpop.f32.mrb[0].mxu0
        %v900 = vadd.f32 0.0, %v899
        %v901 = vpop.f32.mrb[0].mxu0
        %v902 = vpop.f32.mrb[0].mxu0
        %v903 = vadd.f32 0.0, %v902
        %v904 = vpop.f32.mrb[0].mxu0
        %905 = vdwg.mxu0
        %s906 = scalar_lea.vmem %s6, 32
        %v907 = vld [vmem:[%s906] sm:$0xf]
        %v908 = vld [vmem:[%s906 + $0x4] sm:$0xf]
        %v909 = vld [vmem:[%s906 + $0x8] sm:$0xf]
        %v910 = vld [vmem:[%s906 + $0xc] sm:$0xf]
        %v915 = vunpack.c.l.b16 %v907
        %v916 = vunpack.c.l.b16 %v908
        %v917 = vunpack.c.l.b16 %v909
        %v918 = vunpack.c.l.b16 %v910
        %v919 = vpack.c.b16 %v916, %v915
        %v920 = vpack.c.b16 %v918, %v917
        %923 = vmatprep.subr.bf16.mxu0 0
        %924 = vmatpush1.bf16.msra.mxu0 %v919
        %925 = vmatprep.subr.bf16.mxu0 0
        %926 = vmatpush1.bf16.msra.mxu0 %v920
        %927 = vmatprep.subr.bf16.mxu0 0
        %928 = vmatpush1.bf16.msra.mxu0 0
        %929 = vmatprep.subr.bf16.mxu0 0
        %930 = vmatpush1.bf16.msra.mxu0 0
        %931 = vmatprep.subr.bf16.mxu0 0
        %932 = vmatpush1.bf16.msra.mxu0 0
        %933 = vmatprep.subr.bf16.mxu0 0
        %934 = vmatpush1.bf16.msra.mxu0 0
        %935 = vmatprep.subr.bf16.mxu0 0
        %936 = vmatpush1.bf16.msra.mxu0 0
        %937 = vmatprep.subr.bf16.mxu0 0
        %938 = vmatpush1.bf16.msra.mxu0 0
        %939 = vmatprep.subr.bf16.mxu0 0
        %940 = vmatpush1.bf16.msra.mxu0 0
        %941 = vmatprep.subr.bf16.mxu0 0
        %942 = vmatpush1.bf16.msra.mxu0 0
        %943 = vmatprep.subr.bf16.mxu0 0
        %944 = vmatpush1.bf16.msra.mxu0 0
        %945 = vmatprep.subr.bf16.mxu0 0
        %946 = vmatpush1.bf16.msra.mxu0 0
        %947 = vmatprep.subr.bf16.mxu0 0
        %948 = vmatpush1.bf16.msra.mxu0 0
        %949 = vmatprep.subr.bf16.mxu0 0
        %950 = vmatpush1.bf16.msra.mxu0 0
        %951 = vmatprep.subr.bf16.mxu0 0
        %952 = vmatpush1.bf16.msra.mxu0 0
        %953 = vmatprep.subr.bf16.mxu0 0
        %954 = vmatpush1.bf16.msra.mxu0 0
        %955 = vmatprep.mubr.bf16.mxu0 0
        %956 = vmatmul.mubr.bf16.gmra.mrb[0].mxu0 %v805
        %v957 = vpop.f32.mrb[0].mxu0
        %v958 = vadd.f32 0.0, %v957
        %v959 = vpop.f32.mrb[0].mxu0
        %v960 = vpop.f32.mrb[0].mxu0
        %v961 = vadd.f32 0.0, %v960
        %v962 = vpop.f32.mrb[0].mxu0
        %963 = vdwg.mxu0
        %s964 = scalar_lea.vmem %s6, 48
        %v965 = vld [vmem:[%s964] sm:$0xf]
        %v966 = vld [vmem:[%s964 + $0x4] sm:$0xf]
        %v967 = vld [vmem:[%s964 + $0x8] sm:$0xf]
        %v968 = vld [vmem:[%s964 + $0xc] sm:$0xf]
        %v973 = vunpack.c.l.b16 %v965
        %v974 = vunpack.c.l.b16 %v966
        %v975 = vunpack.c.l.b16 %v967
        %v976 = vunpack.c.l.b16 %v968
        %v977 = vpack.c.b16 %v974, %v973
        %v978 = vpack.c.b16 %v976, %v975
        %981 = vmatprep.subr.bf16.mxu0 0
        %982 = vmatpush1.bf16.msra.mxu0 %v977
        %983 = vmatprep.subr.bf16.mxu0 0
        %984 = vmatpush1.bf16.msra.mxu0 %v978
        %985 = vmatprep.subr.bf16.mxu0 0
        %986 = vmatpush1.bf16.msra.mxu0 0
        %987 = vmatprep.subr.bf16.mxu0 0
        %988 = vmatpush1.bf16.msra.mxu0 0
        %989 = vmatprep.subr.bf16.mxu0 0
        %990 = vmatpush1.bf16.msra.mxu0 0
        %991 = vmatprep.subr.bf16.mxu0 0
        %992 = vmatpush1.bf16.msra.mxu0 0
        %993 = vmatprep.subr.bf16.mxu0 0
        %994 = vmatpush1.bf16.msra.mxu0 0
        %995 = vmatprep.subr.bf16.mxu0 0
        %996 = vmatpush1.bf16.msra.mxu0 0
        %997 = vmatprep.subr.bf16.mxu0 0
        %998 = vmatpush1.bf16.msra.mxu0 0
        %999 = vmatprep.subr.bf16.mxu0 0
        %1000 = vmatpush1.bf16.msra.mxu0 0
        %1001 = vmatprep.subr.bf16.mxu0 0
        %1002 = vmatpush1.bf16.msra.mxu0 0
        %1003 = vmatprep.subr.bf16.mxu0 0
        %1004 = vmatpush1.bf16.msra.mxu0 0
        %1005 = vmatprep.subr.bf16.mxu0 0
        %1006 = vmatpush1.bf16.msra.mxu0 0
        %1007 = vmatprep.subr.bf16.mxu0 0
        %1008 = vmatpush1.bf16.msra.mxu0 0
        %1009 = vmatprep.subr.bf16.mxu0 0
        %1010 = vmatpush1.bf16.msra.mxu0 0
        %1011 = vmatprep.subr.bf16.mxu0 0
        %1012 = vmatpush1.bf16.msra.mxu0 0
        %1013 = vmatprep.mubr.bf16.mxu0 0
        %1014 = vmatmul.mubr.bf16.gmra.mrb[0].mxu0 %v805
        %v1015 = vpop.f32.mrb[0].mxu0
        %v1016 = vadd.f32 0.0, %v1015
        %v1017 = vpop.f32.mrb[0].mxu0
        %v1018 = vpop.f32.mrb[0].mxu0
        %v1019 = vadd.f32 0.0, %v1018
        %v1020 = vpop.f32.mrb[0].mxu0
        %1021 = vdwg.mxu0
        %v1022 = vld [vmem:[%s7] sm:$0x1]
        %v1023 = vld [vmem:[%s7 + $0x1] sm:$0x1]
        %v1024 = vld [vmem:[%s7 + $0x2] sm:$0x1]
        %v1025 = vld [vmem:[%s7 + $0x3] sm:$0x1]
        %v1030 = vlaneseq
        %v1031 = vshrl.u32 %v1030, 7
        %v1032 = vsub.s32 0, %v1031
        %v1033 = vrot.slane %v1022, %v1032
        %v1034 = vlaneseq
        %v1035 = vshrl.u32 %v1034, 7
        %v1036 = vsub.s32 0, %v1035
        %v1037 = vrot.slane %v1023, %v1036
        %v1038 = vlaneseq
        %v1039 = vshrl.u32 %v1038, 7
        %v1040 = vsub.s32 0, %v1039
        %v1041 = vrot.slane %v1024, %v1040
        %v1042 = vlaneseq
        %v1043 = vshrl.u32 %v1042, 7
        %v1044 = vsub.s32 0, %v1043
        %v1045 = vrot.slane %v1025, %v1044
        %v1050 = vadd.f32 %v842, %v1033
        %v1051 = vadd.f32 %v845, %v1033
        %v1052 = vadd.f32 %v900, %v1037
        %v1053 = vadd.f32 %v903, %v1037
        %v1054 = vadd.f32 %v958, %v1041
        %v1055 = vadd.f32 %v961, %v1041
        %v1056 = vadd.f32 %v1016, %v1045
        %v1057 = vadd.f32 %v1019, %v1045
        %v1058 = vpack.c.bf16 %v1051, %v1050
        %v1059 = vpack.c.bf16 %v1053, %v1052
        %v1060 = vpack.c.bf16 %v1055, %v1054
        %v1061 = vpack.c.bf16 %v1057, %v1056
        %v1066 = vunpack.c.l.b16 %v1058
        %v1067 = vunpack.c.h.b16 %v1058
        %v1068 = vunpack.c.l.b16 %v1059
        %v1069 = vunpack.c.h.b16 %v1059
        %v1070 = vunpack.c.l.b16 %v1060
        %v1071 = vunpack.c.h.b16 %v1060
        %v1072 = vunpack.c.l.b16 %v1061
        %v1073 = vunpack.c.h.b16 %v1061
        %v1074 = vpack.c.b16 %v1066, %v1066
        %v1075 = vpack.c.b16 %v1067, %v1067
        %v1076 = vpack.c.b16 %v1068, %v1068
        %v1077 = vpack.c.b16 %v1069, %v1069
        %v1078 = vpack.c.b16 %v1070, %v1070
        %v1079 = vpack.c.b16 %v1071, %v1071
        %v1080 = vpack.c.b16 %v1072, %v1072
        %v1081 = vpack.c.b16 %v1073, %v1073
        %v1082 = vld [vmem:[%s470] sm:$0xf]
        %v1083 = vld [vmem:[%s470 + $0x4] sm:$0xf]
        %v1084 = vld [vmem:[%s8] sm:$0xf]
        %v1085 = vld [vmem:[%s8 + $0x4] sm:$0xf]
        %v1086 = vld [vmem:[%s8 + $0x8] sm:$0xf]
        %v1087 = vld [vmem:[%s8 + $0xc] sm:$0xf]
        %v1090 = vunpack.c.l.b16 %v1082
        %v1091 = vunpack.c.l.b16 %v1083
        %v1092 = vpack.c.b16 %v1091, %v1090
        %v1097 = vunpack.c.l.b16 %v1084
        %v1098 = vunpack.c.l.b16 %v1085
        %v1099 = vunpack.c.l.b16 %v1086
        %v1100 = vunpack.c.l.b16 %v1087
        %v1101 = vpack.c.b16 %v1098, %v1097
        %v1102 = vpack.c.b16 %v1100, %v1099
        %v1106 = vsel %vm502, %v1092, 0
        %1108 = vmatprep.subr.bf16.mxu0 0
        %1109 = vmatpush1.bf16.msra.mxu0 %v1101
        %1110 = vmatprep.subr.bf16.mxu0 0
        %1111 = vmatpush1.bf16.msra.mxu0 %v1102
        %1112 = vmatprep.subr.bf16.mxu0 0
        %1113 = vmatpush1.bf16.msra.mxu0 0
        %1114 = vmatprep.subr.bf16.mxu0 0
        %1115 = vmatpush1.bf16.msra.mxu0 0
        %1116 = vmatprep.subr.bf16.mxu0 0
        %1117 = vmatpush1.bf16.msra.mxu0 0
        %1118 = vmatprep.subr.bf16.mxu0 0
        %1119 = vmatpush1.bf16.msra.mxu0 0
        %1120 = vmatprep.subr.bf16.mxu0 0
        %1121 = vmatpush1.bf16.msra.mxu0 0
        %1122 = vmatprep.subr.bf16.mxu0 0
        %1123 = vmatpush1.bf16.msra.mxu0 0
        %1124 = vmatprep.subr.bf16.mxu0 0
        %1125 = vmatpush1.bf16.msra.mxu0 0
        %1126 = vmatprep.subr.bf16.mxu0 0
        %1127 = vmatpush1.bf16.msra.mxu0 0
        %1128 = vmatprep.subr.bf16.mxu0 0
        %1129 = vmatpush1.bf16.msra.mxu0 0
        %1130 = vmatprep.subr.bf16.mxu0 0
        %1131 = vmatpush1.bf16.msra.mxu0 0
        %1132 = vmatprep.subr.bf16.mxu0 0
        %1133 = vmatpush1.bf16.msra.mxu0 0
        %1134 = vmatprep.subr.bf16.mxu0 0
        %1135 = vmatpush1.bf16.msra.mxu0 0
        %1136 = vmatprep.subr.bf16.mxu0 0
        %1137 = vmatpush1.bf16.msra.mxu0 0
        %1138 = vmatprep.subr.bf16.mxu0 0
        %1139 = vmatpush1.bf16.msra.mxu0 0
        %1140 = vmatprep.mubr.bf16.mxu0 0
        %1141 = vmatmul.mubr.bf16.gmra.mrb[0].mxu0 %v1106
        %v1142 = vpop.f32.mrb[0].mxu0
        %v1143 = vadd.f32 0.0, %v1142
        %v1144 = vpop.f32.mrb[0].mxu0
        %v1145 = vpop.f32.mrb[0].mxu0
        %v1146 = vadd.f32 0.0, %v1145
        %v1147 = vpop.f32.mrb[0].mxu0
        %1148 = vdwg.mxu0
        %s1149 = scalar_lea.vmem %s8, 16
        %v1150 = vld [vmem:[%s1149] sm:$0xf]
        %v1151 = vld [vmem:[%s1149 + $0x4] sm:$0xf]
        %v1152 = vld [vmem:[%s1149 + $0x8] sm:$0xf]
        %v1153 = vld [vmem:[%s1149 + $0xc] sm:$0xf]
        %v1158 = vunpack.c.l.b16 %v1150
        %v1159 = vunpack.c.l.b16 %v1151
        %v1160 = vunpack.c.l.b16 %v1152
        %v1161 = vunpack.c.l.b16 %v1153
        %v1162 = vpack.c.b16 %v1159, %v1158
        %v1163 = vpack.c.b16 %v1161, %v1160
        %1166 = vmatprep.subr.bf16.mxu0 0
        %1167 = vmatpush1.bf16.msra.mxu0 %v1162
        %1168 = vmatprep.subr.bf16.mxu0 0
        %1169 = vmatpush1.bf16.msra.mxu0 %v1163
        %1170 = vmatprep.subr.bf16.mxu0 0
        %1171 = vmatpush1.bf16.msra.mxu0 0
        %1172 = vmatprep.subr.bf16.mxu0 0
        %1173 = vmatpush1.bf16.msra.mxu0 0
        %1174 = vmatprep.subr.bf16.mxu0 0
        %1175 = vmatpush1.bf16.msra.mxu0 0
        %1176 = vmatprep.subr.bf16.mxu0 0
        %1177 = vmatpush1.bf16.msra.mxu0 0
        %1178 = vmatprep.subr.bf16.mxu0 0
        %1179 = vmatpush1.bf16.msra.mxu0 0
        %1180 = vmatprep.subr.bf16.mxu0 0
        %1181 = vmatpush1.bf16.msra.mxu0 0
        %1182 = vmatprep.subr.bf16.mxu0 0
        %1183 = vmatpush1.bf16.msra.mxu0 0
        %1184 = vmatprep.subr.bf16.mxu0 0
        %1185 = vmatpush1.bf16.msra.mxu0 0
        %1186 = vmatprep.subr.bf16.mxu0 0
        %1187 = vmatpush1.bf16.msra.mxu0 0
        %1188 = vmatprep.subr.bf16.mxu0 0
        %1189 = vmatpush1.bf16.msra.mxu0 0
        %1190 = vmatprep.subr.bf16.mxu0 0
        %1191 = vmatpush1.bf16.msra.mxu0 0
        %1192 = vmatprep.subr.bf16.mxu0 0
        %1193 = vmatpush1.bf16.msra.mxu0 0
        %1194 = vmatprep.subr.bf16.mxu0 0
        %1195 = vmatpush1.bf16.msra.mxu0 0
        %1196 = vmatprep.subr.bf16.mxu0 0
        %1197 = vmatpush1.bf16.msra.mxu0 0
        %1198 = vmatprep.mubr.bf16.mxu0 0
        %1199 = vmatmul.mubr.bf16.gmra.mrb[0].mxu0 %v1106
        %v1200 = vpop.f32.mrb[0].mxu0
        %v1201 = vadd.f32 0.0, %v1200
        %v1202 = vpop.f32.mrb[0].mxu0
        %v1203 = vpop.f32.mrb[0].mxu0
        %v1204 = vadd.f32 0.0, %v1203
        %v1205 = vpop.f32.mrb[0].mxu0
        %1206 = vdwg.mxu0
        %s1207 = scalar_lea.vmem %s8, 32
        %v1208 = vld [vmem:[%s1207] sm:$0xf]
        %v1209 = vld [vmem:[%s1207 + $0x4] sm:$0xf]
        %v1210 = vld [vmem:[%s1207 + $0x8] sm:$0xf]
        %v1211 = vld [vmem:[%s1207 + $0xc] sm:$0xf]
        %v1216 = vunpack.c.l.b16 %v1208
        %v1217 = vunpack.c.l.b16 %v1209
        %v1218 = vunpack.c.l.b16 %v1210
        %v1219 = vunpack.c.l.b16 %v1211
        %v1220 = vpack.c.b16 %v1217, %v1216
        %v1221 = vpack.c.b16 %v1219, %v1218
        %1224 = vmatprep.subr.bf16.mxu0 0
        %1225 = vmatpush1.bf16.msra.mxu0 %v1220
        %1226 = vmatprep.subr.bf16.mxu0 0
        %1227 = vmatpush1.bf16.msra.mxu0 %v1221
        %1228 = vmatprep.subr.bf16.mxu0 0
        %1229 = vmatpush1.bf16.msra.mxu0 0
        %1230 = vmatprep.subr.bf16.mxu0 0
        %1231 = vmatpush1.bf16.msra.mxu0 0
        %1232 = vmatprep.subr.bf16.mxu0 0
        %1233 = vmatpush1.bf16.msra.mxu0 0
        %1234 = vmatprep.subr.bf16.mxu0 0
        %1235 = vmatpush1.bf16.msra.mxu0 0
        %1236 = vmatprep.subr.bf16.mxu0 0
        %1237 = vmatpush1.bf16.msra.mxu0 0
        %1238 = vmatprep.subr.bf16.mxu0 0
        %1239 = vmatpush1.bf16.msra.mxu0 0
        %1240 = vmatprep.subr.bf16.mxu0 0
        %1241 = vmatpush1.bf16.msra.mxu0 0
        %1242 = vmatprep.subr.bf16.mxu0 0
        %1243 = vmatpush1.bf16.msra.mxu0 0
        %1244 = vmatprep.subr.bf16.mxu0 0
        %1245 = vmatpush1.bf16.msra.mxu0 0
        %1246 = vmatprep.subr.bf16.mxu0 0
        %1247 = vmatpush1.bf16.msra.mxu0 0
        %1248 = vmatprep.subr.bf16.mxu0 0
        %1249 = vmatpush1.bf16.msra.mxu0 0
        %1250 = vmatprep.subr.bf16.mxu0 0
        %1251 = vmatpush1.bf16.msra.mxu0 0
        %1252 = vmatprep.subr.bf16.mxu0 0
        %1253 = vmatpush1.bf16.msra.mxu0 0
        %1254 = vmatprep.subr.bf16.mxu0 0
        %1255 = vmatpush1.bf16.msra.mxu0 0
        %1256 = vmatprep.mubr.bf16.mxu0 0
        %1257 = vmatmul.mubr.bf16.gmra.mrb[0].mxu0 %v1106
        %v1258 = vpop.f32.mrb[0].mxu0
        %v1259 = vadd.f32 0.0, %v1258
        %v1260 = vpop.f32.mrb[0].mxu0
        %v1261 = vpop.f32.mrb[0].mxu0
        %v1262 = vadd.f32 0.0, %v1261
        %v1263 = vpop.f32.mrb[0].mxu0
        %1264 = vdwg.mxu0
        %s1265 = scalar_lea.vmem %s8, 48
        %v1266 = vld [vmem:[%s1265] sm:$0xf]
        %v1267 = vld [vmem:[%s1265 + $0x4] sm:$0xf]
        %v1268 = vld [vmem:[%s1265 + $0x8] sm:$0xf]
        %v1269 = vld [vmem:[%s1265 + $0xc] sm:$0xf]
        %v1274 = vunpack.c.l.b16 %v1266
        %v1275 = vunpack.c.l.b16 %v1267
        %v1276 = vunpack.c.l.b16 %v1268
        %v1277 = vunpack.c.l.b16 %v1269
        %v1278 = vpack.c.b16 %v1275, %v1274
        %v1279 = vpack.c.b16 %v1277, %v1276
        %1282 = vmatprep.subr.bf16.mxu0 0
        %1283 = vmatpush1.bf16.msra.mxu0 %v1278
        %1284 = vmatprep.subr.bf16.mxu0 0
        %1285 = vmatpush1.bf16.msra.mxu0 %v1279
        %1286 = vmatprep.subr.bf16.mxu0 0
        %1287 = vmatpush1.bf16.msra.mxu0 0
        %1288 = vmatprep.subr.bf16.mxu0 0
        %1289 = vmatpush1.bf16.msra.mxu0 0
        %1290 = vmatprep.subr.bf16.mxu0 0
        %1291 = vmatpush1.bf16.msra.mxu0 0
        %1292 = vmatprep.subr.bf16.mxu0 0
        %1293 = vmatpush1.bf16.msra.mxu0 0
        %1294 = vmatprep.subr.bf16.mxu0 0
        %1295 = vmatpush1.bf16.msra.mxu0 0
        %1296 = vmatprep.subr.bf16.mxu0 0
        %1297 = vmatpush1.bf16.msra.mxu0 0
        %1298 = vmatprep.subr.bf16.mxu0 0
        %1299 = vmatpush1.bf16.msra.mxu0 0
        %1300 = vmatprep.subr.bf16.mxu0 0
        %1301 = vmatpush1.bf16.msra.mxu0 0
        %1302 = vmatprep.subr.bf16.mxu0 0
        %1303 = vmatpush1.bf16.msra.mxu0 0
        %1304 = vmatprep.subr.bf16.mxu0 0
        %1305 = vmatpush1.bf16.msra.mxu0 0
        %1306 = vmatprep.subr.bf16.mxu0 0
        %1307 = vmatpush1.bf16.msra.mxu0 0
        %1308 = vmatprep.subr.bf16.mxu0 0
        %1309 = vmatpush1.bf16.msra.mxu0 0
        %1310 = vmatprep.subr.bf16.mxu0 0
        %1311 = vmatpush1.bf16.msra.mxu0 0
        %1312 = vmatprep.subr.bf16.mxu0 0
        %1313 = vmatpush1.bf16.msra.mxu0 0
        %1314 = vmatprep.mubr.bf16.mxu0 0
        %1315 = vmatmul.mubr.bf16.gmra.mrb[0].mxu0 %v1106
        %v1316 = vpop.f32.mrb[0].mxu0
        %v1317 = vadd.f32 0.0, %v1316
        %v1318 = vpop.f32.mrb[0].mxu0
        %v1319 = vpop.f32.mrb[0].mxu0
        %v1320 = vadd.f32 0.0, %v1319
        %v1321 = vpop.f32.mrb[0].mxu0
        %1322 = vdwg.mxu0
        %v1323 = vld [vmem:[%s9] sm:$0x1]
        %v1324 = vld [vmem:[%s9 + $0x1] sm:$0x1]
        %v1325 = vld [vmem:[%s9 + $0x2] sm:$0x1]
        %v1326 = vld [vmem:[%s9 + $0x3] sm:$0x1]
        %v1331 = vlaneseq
        %v1332 = vshrl.u32 %v1331, 7
        %v1333 = vsub.s32 0, %v1332
        %v1334 = vrot.slane %v1323, %v1333
        %v1335 = vlaneseq
        %v1336 = vshrl.u32 %v1335, 7
        %v1337 = vsub.s32 0, %v1336
        %v1338 = vrot.slane %v1324, %v1337
        %v1339 = vlaneseq
        %v1340 = vshrl.u32 %v1339, 7
        %v1341 = vsub.s32 0, %v1340
        %v1342 = vrot.slane %v1325, %v1341
        %v1343 = vlaneseq
        %v1344 = vshrl.u32 %v1343, 7
        %v1345 = vsub.s32 0, %v1344
        %v1346 = vrot.slane %v1326, %v1345
        %v1351 = vadd.f32 %v1143, %v1334
        %v1352 = vadd.f32 %v1146, %v1334
        %v1353 = vadd.f32 %v1201, %v1338
        %v1354 = vadd.f32 %v1204, %v1338
        %v1355 = vadd.f32 %v1259, %v1342
        %v1356 = vadd.f32 %v1262, %v1342
        %v1357 = vadd.f32 %v1317, %v1346
        %v1358 = vadd.f32 %v1320, %v1346
        %v1359 = vpack.c.bf16 %v1352, %v1351
        %v1360 = vpack.c.bf16 %v1354, %v1353
        %v1361 = vpack.c.bf16 %v1356, %v1355
        %v1362 = vpack.c.bf16 %v1358, %v1357
        %v1367 = vunpack.c.l.b16 %v1359
        %v1368 = vunpack.c.h.b16 %v1359
        %v1369 = vunpack.c.l.b16 %v1360
        %v1370 = vunpack.c.h.b16 %v1360
        %v1371 = vunpack.c.l.b16 %v1361
        %v1372 = vunpack.c.h.b16 %v1361
        %v1373 = vunpack.c.l.b16 %v1362
        %v1374 = vunpack.c.h.b16 %v1362
        %v1375 = vpack.c.b16 %v1367, %v1367
        %v1376 = vpack.c.b16 %v1368, %v1368
        %v1377 = vpack.c.b16 %v1369, %v1369
        %v1378 = vpack.c.b16 %v1370, %v1370
        %v1379 = vpack.c.b16 %v1371, %v1371
        %v1380 = vpack.c.b16 %v1372, %v1372
        %v1381 = vpack.c.b16 %v1373, %v1373
        %v1382 = vpack.c.b16 %v1374, %v1374
        %v1383 = vld [vmem:[%s475] sm:$0x1]
        %v1384 = vld [vmem:[%s475 + $0x1] sm:$0x1]
        %v1387 = vlaneseq
        %v1388 = vshrl.u32 %v1387, 7
        %v1389 = vsub.s32 0, %v1388
        %v1390 = vrot.slane %v1383, %v1389
        %v1391 = vlaneseq
        %v1392 = vshrl.u32 %v1391, 7
        %v1393 = vsub.s32 0, %v1392
        %v1394 = vrot.slane %v1384, %v1393
        %vm1397 = vcmask 64512
        %v1399 = vsel %vm1397, %v773, 0
        %v1402 = vsel %vm1397, %v1074, 0
        %1404 = vmatprep.subr.bf16.mxu0 0
        %1405 = vmatpush1.bf16.xpose.msra.mxu0 %v1402
        %1406 = vmatprep.subr.bf16.mxu0 0
        %1407 = vmatpush1.bf16.xpose.msra.mxu0 0
        %1408 = vmatprep.subr.bf16.mxu0 0
        %1409 = vmatpush1.bf16.xpose.msra.mxu0 0
        %1410 = vmatprep.subr.bf16.mxu0 0
        %1411 = vmatpush1.bf16.xpose.msra.mxu0 0
        %1412 = vmatprep.subr.bf16.mxu0 0
        %1413 = vmatpush1.bf16.xpose.msra.mxu0 0
        %1414 = vmatprep.subr.bf16.mxu0 0
        %1415 = vmatpush1.bf16.xpose.msra.mxu0 0
        %1416 = vmatprep.subr.bf16.mxu0 0
        %1417 = vmatpush1.bf16.xpose.msra.mxu0 0
        %1418 = vmatprep.subr.bf16.mxu0 0
        %1419 = vmatpush1.bf16.xpose.msra.mxu0 0
        %1420 = vmatprep.subr.bf16.mxu0 0
        %1421 = vmatpush1.bf16.xpose.msra.mxu0 0
        %1422 = vmatprep.subr.bf16.mxu0 0
        %1423 = vmatpush1.bf16.xpose.msra.mxu0 0
        %1424 = vmatprep.subr.bf16.mxu0 0
        %1425 = vmatpush1.bf16.xpose.msra.mxu0 0
        %1426 = vmatprep.subr.bf16.mxu0 0
        %1427 = vmatpush1.bf16.xpose.msra.mxu0 0
        %1428 = vmatprep.subr.bf16.mxu0 0
        %1429 = vmatpush1.bf16.xpose.msra.mxu0 0
        %1430 = vmatprep.subr.bf16.mxu0 0
        %1431 = vmatpush1.bf16.xpose.msra.mxu0 0
        %1432 = vmatprep.subr.bf16.mxu0 0
        %1433 = vmatpush1.bf16.xpose.msra.mxu0 0
        %1434 = vmatprep.subr.bf16.mxu0 0
        %1435 = vmatpush1.bf16.xpose.msra.mxu0 0
        %1436 = vmatprep.mubr.bf16.mxu0 0
        %1437 = vmatmul.mubr.bf16.gmra.mrb[0].mxu0 %v1399
        %v1438 = vpop.f32.mrb[0].mxu0
        %v1439 = vadd.f32 %v1390, %v1438
        %v1440 = vpop.f32.mrb[0].mxu0
        %v1441 = vpop.f32.mrb[0].mxu0
        %v1442 = vpop.f32.mrb[0].mxu0
        %1443 = vdwg.mxu0
        %v1445 = vsel %vm1397, %v774, 0
        %v1448 = vsel %vm1397, %v1075, 0
        %1450 = vmatprep.subr.bf16.mxu0 0
        %1451 = vmatpush1.bf16.xpose.msra.mxu0 %v1448
        %1452 = vmatprep.subr.bf16.mxu0 0
        %1453 = vmatpush1.bf16.xpose.msra.mxu0 0
        %1454 = vmatprep.subr.bf16.mxu0 0
        %1455 = vmatpush1.bf16.xpose.msra.mxu0 0
        %1456 = vmatprep.subr.bf16.mxu0 0
        %1457 = vmatpush1.bf16.xpose.msra.mxu0 0
        %1458 = vmatprep.subr.bf16.mxu0 0
        %1459 = vmatpush1.bf16.xpose.msra.mxu0 0
        %1460 = vmatprep.subr.bf16.mxu0 0
        %1461 = vmatpush1.bf16.xpose.msra.mxu0 0
        %1462 = vmatprep.subr.bf16.mxu0 0
        %1463 = vmatpush1.bf16.xpose.msra.mxu0 0
        %1464 = vmatprep.subr.bf16.mxu0 0
        %1465 = vmatpush1.bf16.xpose.msra.mxu0 0
        %1466 = vmatprep.subr.bf16.mxu0 0
        %1467 = vmatpush1.bf16.xpose.msra.mxu0 0
        %1468 = vmatprep.subr.bf16.mxu0 0
        %1469 = vmatpush1.bf16.xpose.msra.mxu0 0
        %1470 = vmatprep.subr.bf16.mxu0 0
        %1471 = vmatpush1.bf16.xpose.msra.mxu0 0
        %1472 = vmatprep.subr.bf16.mxu0 0
        %1473 = vmatpush1.bf16.xpose.msra.mxu0 0
        %1474 = vmatprep.subr.bf16.mxu0 0
        %1475 = vmatpush1.bf16.xpose.msra.mxu0 0
        %1476 = vmatprep.subr.bf16.mxu0 0
        %1477 = vmatpush1.bf16.xpose.msra.mxu0 0
        %1478 = vmatprep.subr.bf16.mxu0 0
        %1479 = vmatpush1.bf16.xpose.msra.mxu0 0
        %1480 = vmatprep.subr.bf16.mxu0 0
        %1481 = vmatpush1.bf16.xpose.msra.mxu0 0
        %1482 = vmatprep.mubr.bf16.mxu0 0
        %1483 = vmatmul.mubr.bf16.gmra.mrb[0].mxu0 %v1445
        %v1484 = vpop.f32.mrb[0].mxu0
        %v1485 = vadd.f32 %v1394, %v1484
        %v1486 = vpop.f32.mrb[0].mxu0
        %v1487 = vpop.f32.mrb[0].mxu0
        %v1488 = vpop.f32.mrb[0].mxu0
        %1489 = vdwg.mxu0
        %v1491 = vsel %vm1397, %v775, 0
        %v1494 = vsel %vm1397, %v1076, 0
        %1496 = vmatprep.subr.bf16.mxu0 0
        %1497 = vmatpush1.bf16.xpose.msra.mxu0 %v1494
        %1498 = vmatprep.subr.bf16.mxu0 0
        %1499 = vmatpush1.bf16.xpose.msra.mxu0 0
        %1500 = vmatprep.subr.bf16.mxu0 0
        %1501 = vmatpush1.bf16.xpose.msra.mxu0 0
        %1502 = vmatprep.subr.bf16.mxu0 0
        %1503 = vmatpush1.bf16.xpose.msra.mxu0 0
        %1504 = vmatprep.subr.bf16.mxu0 0
        %1505 = vmatpush1.bf16.xpose.msra.mxu0 0
        %1506 = vmatprep.subr.bf16.mxu0 0
        %1507 = vmatpush1.bf16.xpose.msra.mxu0 0
        %1508 = vmatprep.subr.bf16.mxu0 0
        %1509 = vmatpush1.bf16.xpose.msra.mxu0 0
        %1510 = vmatprep.subr.bf16.mxu0 0
        %1511 = vmatpush1.bf16.xpose.msra.mxu0 0
        %1512 = vmatprep.subr.bf16.mxu0 0
        %1513 = vmatpush1.bf16.xpose.msra.mxu0 0
        %1514 = vmatprep.subr.bf16.mxu0 0
        %1515 = vmatpush1.bf16.xpose.msra.mxu0 0
        %1516 = vmatprep.subr.bf16.mxu0 0
        %1517 = vmatpush1.bf16.xpose.msra.mxu0 0
        %1518 = vmatprep.subr.bf16.mxu0 0
        %1519 = vmatpush1.bf16.xpose.msra.mxu0 0
        %1520 = vmatprep.subr.bf16.mxu0 0
        %1521 = vmatpush1.bf16.xpose.msra.mxu0 0
        %1522 = vmatprep.subr.bf16.mxu0 0
        %1523 = vmatpush1.bf16.xpose.msra.mxu0 0
        %1524 = vmatprep.subr.bf16.mxu0 0
        %1525 = vmatpush1.bf16.xpose.msra.mxu0 0
        %1526 = vmatprep.subr.bf16.mxu0 0
        %1527 = vmatpush1.bf16.xpose.msra.mxu0 0
        %1528 = vmatprep.mubr.bf16.mxu0 0
        %1529 = vmatmul.mubr.bf16.gmra.mrb[0].mxu0 %v1491
        %v1530 = vpop.f32.mrb[0].mxu0
        %v1531 = vadd.f32 %v1390, %v1530
        %v1532 = vpop.f32.mrb[0].mxu0
        %v1533 = vpop.f32.mrb[0].mxu0
        %v1534 = vpop.f32.mrb[0].mxu0
        %1535 = vdwg.mxu0
        %v1537 = vsel %vm1397, %v776, 0
        %v1540 = vsel %vm1397, %v1077, 0
        %1542 = vmatprep.subr.bf16.mxu0 0
        %1543 = vmatpush1.bf16.xpose.msra.mxu0 %v1540
        %1544 = vmatprep.subr.bf16.mxu0 0
        %1545 = vmatpush1.bf16.xpose.msra.mxu0 0
        %1546 = vmatprep.subr.bf16.mxu0 0
        %1547 = vmatpush1.bf16.xpose.msra.mxu0 0
        %1548 = vmatprep.subr.bf16.mxu0 0
        %1549 = vmatpush1.bf16.xpose.msra.mxu0 0
        %1550 = vmatprep.subr.bf16.mxu0 0
        %1551 = vmatpush1.bf16.xpose.msra.mxu0 0
        %1552 = vmatprep.subr.bf16.mxu0 0
        %1553 = vmatpush1.bf16.xpose.msra.mxu0 0
        %1554 = vmatprep.subr.bf16.mxu0 0
        %1555 = vmatpush1.bf16.xpose.msra.mxu0 0
        %1556 = vmatprep.subr.bf16.mxu0 0
        %1557 = vmatpush1.bf16.xpose.msra.mxu0 0
        %1558 = vmatprep.subr.bf16.mxu0 0
        %1559 = vmatpush1.bf16.xpose.msra.mxu0 0
        %1560 = vmatprep.subr.bf16.mxu0 0
        %1561 = vmatpush1.bf16.xpose.msra.mxu0 0
        %1562 = vmatprep.subr.bf16.mxu0 0
        %1563 = vmatpush1.bf16.xpose.msra.mxu0 0
        %1564 = vmatprep.subr.bf16.mxu0 0
        %1565 = vmatpush1.bf16.xpose.msra.mxu0 0
        %1566 = vmatprep.subr.bf16.mxu0 0
        %1567 = vmatpush1.bf16.xpose.msra.mxu0 0
        %1568 = vmatprep.subr.bf16.mxu0 0
        %1569 = vmatpush1.bf16.xpose.msra.mxu0 0
        %1570 = vmatprep.subr.bf16.mxu0 0
        %1571 = vmatpush1.bf16.xpose.msra.mxu0 0
        %1572 = vmatprep.subr.bf16.mxu0 0
        %1573 = vmatpush1.bf16.xpose.msra.mxu0 0
        %1574 = vmatprep.mubr.bf16.mxu0 0
        %1575 = vmatmul.mubr.bf16.gmra.mrb[0].mxu0 %v1537
        %v1576 = vpop.f32.mrb[0].mxu0
        %v1577 = vadd.f32 %v1394, %v1576
        %v1578 = vpop.f32.mrb[0].mxu0
        %v1579 = vpop.f32.mrb[0].mxu0
        %v1580 = vpop.f32.mrb[0].mxu0
        %1581 = vdwg.mxu0
        %v1583 = vsel %vm1397, %v777, 0
        %v1586 = vsel %vm1397, %v1078, 0
        %1588 = vmatprep.subr.bf16.mxu0 0
        %1589 = vmatpush1.bf16.xpose.msra.mxu0 %v1586
        %1590 = vmatprep.subr.bf16.mxu0 0
        %1591 = vmatpush1.bf16.xpose.msra.mxu0 0
        %1592 = vmatprep.subr.bf16.mxu0 0
        %1593 = vmatpush1.bf16.xpose.msra.mxu0 0
        %1594 = vmatprep.subr.bf16.mxu0 0
        %1595 = vmatpush1.bf16.xpose.msra.mxu0 0
        %1596 = vmatprep.subr.bf16.mxu0 0
        %1597 = vmatpush1.bf16.xpose.msra.mxu0 0
        %1598 = vmatprep.subr.bf16.mxu0 0
        %1599 = vmatpush1.bf16.xpose.msra.mxu0 0
        %1600 = vmatprep.subr.bf16.mxu0 0
        %1601 = vmatpush1.bf16.xpose.msra.mxu0 0
        %1602 = vmatprep.subr.bf16.mxu0 0
        %1603 = vmatpush1.bf16.xpose.msra.mxu0 0
        %1604 = vmatprep.subr.bf16.mxu0 0
        %1605 = vmatpush1.bf16.xpose.msra.mxu0 0
        %1606 = vmatprep.subr.bf16.mxu0 0
        %1607 = vmatpush1.bf16.xpose.msra.mxu0 0
        %1608 = vmatprep.subr.bf16.mxu0 0
        %1609 = vmatpush1.bf16.xpose.msra.mxu0 0
        %1610 = vmatprep.subr.bf16.mxu0 0
        %1611 = vmatpush1.bf16.xpose.msra.mxu0 0
        %1612 = vmatprep.subr.bf16.mxu0 0
        %1613 = vmatpush1.bf16.xpose.msra.mxu0 0
        %1614 = vmatprep.subr.bf16.mxu0 0
        %1615 = vmatpush1.bf16.xpose.msra.mxu0 0
        %1616 = vmatprep.subr.bf16.mxu0 0
        %1617 = vmatpush1.bf16.xpose.msra.mxu0 0
        %1618 = vmatprep.subr.bf16.mxu0 0
        %1619 = vmatpush1.bf16.xpose.msra.mxu0 0
        %1620 = vmatprep.mubr.bf16.mxu0 0
        %1621 = vmatmul.mubr.bf16.gmra.mrb[0].mxu0 %v1583
        %v1622 = vpop.f32.mrb[0].mxu0
        %v1623 = vadd.f32 %v1390, %v1622
        %v1624 = vpop.f32.mrb[0].mxu0
        %v1625 = vpop.f32.mrb[0].mxu0
        %v1626 = vpop.f32.mrb[0].mxu0
        %1627 = vdwg.mxu0
        %v1629 = vsel %vm1397, %v778, 0
        %v1632 = vsel %vm1397, %v1079, 0
        %1634 = vmatprep.subr.bf16.mxu0 0
        %1635 = vmatpush1.bf16.xpose.msra.mxu0 %v1632
        %1636 = vmatprep.subr.bf16.mxu0 0
        %1637 = vmatpush1.bf16.xpose.msra.mxu0 0
        %1638 = vmatprep.subr.bf16.mxu0 0
        %1639 = vmatpush1.bf16.xpose.msra.mxu0 0
        %1640 = vmatprep.subr.bf16.mxu0 0
        %1641 = vmatpush1.bf16.xpose.msra.mxu0 0
        %1642 = vmatprep.subr.bf16.mxu0 0
        %1643 = vmatpush1.bf16.xpose.msra.mxu0 0
        %1644 = vmatprep.subr.bf16.mxu0 0
        %1645 = vmatpush1.bf16.xpose.msra.mxu0 0
        %1646 = vmatprep.subr.bf16.mxu0 0
        %1647 = vmatpush1.bf16.xpose.msra.mxu0 0
        %1648 = vmatprep.subr.bf16.mxu0 0
        %1649 = vmatpush1.bf16.xpose.msra.mxu0 0
        %1650 = vmatprep.subr.bf16.mxu0 0
        %1651 = vmatpush1.bf16.xpose.msra.mxu0 0
        %1652 = vmatprep.subr.bf16.mxu0 0
        %1653 = vmatpush1.bf16.xpose.msra.mxu0 0
        %1654 = vmatprep.subr.bf16.mxu0 0
        %1655 = vmatpush1.bf16.xpose.msra.mxu0 0
        %1656 = vmatprep.subr.bf16.mxu0 0
        %1657 = vmatpush1.bf16.xpose.msra.mxu0 0
        %1658 = vmatprep.subr.bf16.mxu0 0
        %1659 = vmatpush1.bf16.xpose.msra.mxu0 0
        %1660 = vmatprep.subr.bf16.mxu0 0
        %1661 = vmatpush1.bf16.xpose.msra.mxu0 0
        %1662 = vmatprep.subr.bf16.mxu0 0
        %1663 = vmatpush1.bf16.xpose.msra.mxu0 0
        %1664 = vmatprep.subr.bf16.mxu0 0
        %1665 = vmatpush1.bf16.xpose.msra.mxu0 0
        %1666 = vmatprep.mubr.bf16.mxu0 0
        %1667 = vmatmul.mubr.bf16.gmra.mrb[0].mxu0 %v1629
        %v1668 = vpop.f32.mrb[0].mxu0
        %v1669 = vadd.f32 %v1394, %v1668
        %v1670 = vpop.f32.mrb[0].mxu0
        %v1671 = vpop.f32.mrb[0].mxu0
        %v1672 = vpop.f32.mrb[0].mxu0
        %1673 = vdwg.mxu0
        %v1675 = vsel %vm1397, %v779, 0
        %v1678 = vsel %vm1397, %v1080, 0
        %1680 = vmatprep.subr.bf16.mxu0 0
        %1681 = vmatpush1.bf16.xpose.msra.mxu0 %v1678
        %1682 = vmatprep.subr.bf16.mxu0 0
        %1683 = vmatpush1.bf16.xpose.msra.mxu0 0
        %1684 = vmatprep.subr.bf16.mxu0 0
        %1685 = vmatpush1.bf16.xpose.msra.mxu0 0
        %1686 = vmatprep.subr.bf16.mxu0 0
        %1687 = vmatpush1.bf16.xpose.msra.mxu0 0
        %1688 = vmatprep.subr.bf16.mxu0 0
        %1689 = vmatpush1.bf16.xpose.msra.mxu0 0
        %1690 = vmatprep.subr.bf16.mxu0 0
        %1691 = vmatpush1.bf16.xpose.msra.mxu0 0
        %1692 = vmatprep.subr.bf16.mxu0 0
        %1693 = vmatpush1.bf16.xpose.msra.mxu0 0
        %1694 = vmatprep.subr.bf16.mxu0 0
        %1695 = vmatpush1.bf16.xpose.msra.mxu0 0
        %1696 = vmatprep.subr.bf16.mxu0 0
        %1697 = vmatpush1.bf16.xpose.msra.mxu0 0
        %1698 = vmatprep.subr.bf16.mxu0 0
        %1699 = vmatpush1.bf16.xpose.msra.mxu0 0
        %1700 = vmatprep.subr.bf16.mxu0 0
        %1701 = vmatpush1.bf16.xpose.msra.mxu0 0
        %1702 = vmatprep.subr.bf16.mxu0 0
        %1703 = vmatpush1.bf16.xpose.msra.mxu0 0
        %1704 = vmatprep.subr.bf16.mxu0 0
        %1705 = vmatpush1.bf16.xpose.msra.mxu0 0
        %1706 = vmatprep.subr.bf16.mxu0 0
        %1707 = vmatpush1.bf16.xpose.msra.mxu0 0
        %1708 = vmatprep.subr.bf16.mxu0 0
        %1709 = vmatpush1.bf16.xpose.msra.mxu0 0
        %1710 = vmatprep.subr.bf16.mxu0 0
        %1711 = vmatpush1.bf16.xpose.msra.mxu0 0
        %1712 = vmatprep.mubr.bf16.mxu0 0
        %1713 = vmatmul.mubr.bf16.gmra.mrb[0].mxu0 %v1675
        %v1714 = vpop.f32.mrb[0].mxu0
        %v1715 = vadd.f32 %v1390, %v1714
        %v1716 = vpop.f32.mrb[0].mxu0
        %v1717 = vpop.f32.mrb[0].mxu0
        %v1718 = vpop.f32.mrb[0].mxu0
        %1719 = vdwg.mxu0
        %v1721 = vsel %vm1397, %v780, 0
        %v1724 = vsel %vm1397, %v1081, 0
        %1726 = vmatprep.subr.bf16.mxu0 0
        %1727 = vmatpush1.bf16.xpose.msra.mxu0 %v1724
        %1728 = vmatprep.subr.bf16.mxu0 0
        %1729 = vmatpush1.bf16.xpose.msra.mxu0 0
        %1730 = vmatprep.subr.bf16.mxu0 0
        %1731 = vmatpush1.bf16.xpose.msra.mxu0 0
        %1732 = vmatprep.subr.bf16.mxu0 0
        %1733 = vmatpush1.bf16.xpose.msra.mxu0 0
        %1734 = vmatprep.subr.bf16.mxu0 0
        %1735 = vmatpush1.bf16.xpose.msra.mxu0 0
        %1736 = vmatprep.subr.bf16.mxu0 0
        %1737 = vmatpush1.bf16.xpose.msra.mxu0 0
        %1738 = vmatprep.subr.bf16.mxu0 0
        %1739 = vmatpush1.bf16.xpose.msra.mxu0 0
        %1740 = vmatprep.subr.bf16.mxu0 0
        %1741 = vmatpush1.bf16.xpose.msra.mxu0 0
        %1742 = vmatprep.subr.bf16.mxu0 0
        %1743 = vmatpush1.bf16.xpose.msra.mxu0 0
        %1744 = vmatprep.subr.bf16.mxu0 0
        %1745 = vmatpush1.bf16.xpose.msra.mxu0 0
        %1746 = vmatprep.subr.bf16.mxu0 0
        %1747 = vmatpush1.bf16.xpose.msra.mxu0 0
        %1748 = vmatprep.subr.bf16.mxu0 0
        %1749 = vmatpush1.bf16.xpose.msra.mxu0 0
        %1750 = vmatprep.subr.bf16.mxu0 0
        %1751 = vmatpush1.bf16.xpose.msra.mxu0 0
        %1752 = vmatprep.subr.bf16.mxu0 0
        %1753 = vmatpush1.bf16.xpose.msra.mxu0 0
        %1754 = vmatprep.subr.bf16.mxu0 0
        %1755 = vmatpush1.bf16.xpose.msra.mxu0 0
        %1756 = vmatprep.subr.bf16.mxu0 0
        %1757 = vmatpush1.bf16.xpose.msra.mxu0 0
        %1758 = vmatprep.mubr.bf16.mxu0 0
        %1759 = vmatmul.mubr.bf16.gmra.mrb[0].mxu0 %v1721
        %v1760 = vpop.f32.mrb[0].mxu0
        %v1761 = vadd.f32 %v1394, %v1760
        %v1762 = vpop.f32.mrb[0].mxu0
        %v1763 = vpop.f32.mrb[0].mxu0
        %v1764 = vpop.f32.mrb[0].mxu0
        %1765 = vdwg.mxu0
        %v1766 = vsel %vm1397, %v1439, -inf
        %1767 = vmax.xlane.f32.xlu0 %v1766
        %v1768 = vpop.xlane.xlu0 %1767
        %v1769 = vsel %vm1397, %v1485, -inf
        %1770 = vmax.xlane.f32.xlu0 %v1769
        %v1771 = vpop.xlane.xlu0 %1770
        %v1772 = vsel %vm1397, %v1531, -inf
        %1773 = vmax.xlane.f32.xlu0 %v1772
        %v1774 = vpop.xlane.xlu0 %1773
        %v1775 = vsel %vm1397, %v1577, -inf
        %1776 = vmax.xlane.f32.xlu0 %v1775
        %v1777 = vpop.xlane.xlu0 %1776
        %v1778 = vsel %vm1397, %v1623, -inf
        %1779 = vmax.xlane.f32.xlu0 %v1778
        %v1780 = vpop.xlane.xlu0 %1779
        %v1781 = vsel %vm1397, %v1669, -inf
        %1782 = vmax.xlane.f32.xlu0 %v1781
        %v1783 = vpop.xlane.xlu0 %1782
        %v1784 = vsel %vm1397, %v1715, -inf
        %1785 = vmax.xlane.f32.xlu0 %v1784
        %v1786 = vpop.xlane.xlu0 %1785
        %v1787 = vsel %vm1397, %v1761, -inf
        %1788 = vmax.xlane.f32.xlu0 %v1787
        %v1789 = vpop.xlane.xlu0 %1788
        %v1790 = vsub.f32 %v1439, %v1768
        %v1791 = vsub.f32 %v1485, %v1771
        %v1792 = vsub.f32 %v1531, %v1774
        %v1793 = vsub.f32 %v1577, %v1777
        %v1794 = vsub.f32 %v1623, %v1780
        %v1795 = vsub.f32 %v1669, %v1783
        %v1796 = vsub.f32 %v1715, %v1786
        %v1797 = vsub.f32 %v1761, %v1789
        %v1798 = vmul.f32 %v1790, 1.442695
        %v1799 = vpow.pop %v1798
        %v1800 = vmul.f32 %v1791, 1.442695
        %v1801 = vpow.pop %v1800
        %v1802 = vmul.f32 %v1792, 1.442695
        %v1803 = vpow.pop %v1802
        %v1804 = vmul.f32 %v1793, 1.442695
        %v1805 = vpow.pop %v1804
        %v1806 = vmul.f32 %v1794, 1.442695
        %v1807 = vpow.pop %v1806
        %v1808 = vmul.f32 %v1795, 1.442695
        %v1809 = vpow.pop %v1808
        %v1810 = vmul.f32 %v1796, 1.442695
        %v1811 = vpow.pop %v1810
        %v1812 = vmul.f32 %v1797, 1.442695
        %v1813 = vpow.pop %v1812
        %v1814 = vsel %vm1397, %v1799, 0.0
        %1815 = vadd.xlane.f32.xlu0 %v1814
        %v1816 = vpop.xlane.xlu0 %1815
        %v1817 = vsel %vm1397, %v1801, 0.0
        %1818 = vadd.xlane.f32.xlu0 %v1817
        %v1819 = vpop.xlane.xlu0 %1818
        %v1820 = vsel %vm1397, %v1803, 0.0
        %1821 = vadd.xlane.f32.xlu0 %v1820
        %v1822 = vpop.xlane.xlu0 %1821
        %v1823 = vsel %vm1397, %v1805, 0.0
        %1824 = vadd.xlane.f32.xlu0 %v1823
        %v1825 = vpop.xlane.xlu0 %1824
        %v1826 = vsel %vm1397, %v1807, 0.0
        %1827 = vadd.xlane.f32.xlu0 %v1826
        %v1828 = vpop.xlane.xlu0 %1827
        %v1829 = vsel %vm1397, %v1809, 0.0
        %1830 = vadd.xlane.f32.xlu0 %v1829
        %v1831 = vpop.xlane.xlu0 %1830
        %v1832 = vsel %vm1397, %v1811, 0.0
        %1833 = vadd.xlane.f32.xlu0 %v1832
        %v1834 = vpop.xlane.xlu0 %1833
        %v1835 = vsel %vm1397, %v1813, 0.0
        %1836 = vadd.xlane.f32.xlu0 %v1835
        %v1837 = vpop.xlane.xlu0 %1836
        %v1838 = vrcp.pop %v1816
        %v1839 = vrcp.pop %v1819
        %v1840 = vrcp.pop %v1822
        %v1841 = vrcp.pop %v1825
        %v1842 = vrcp.pop %v1828
        %v1843 = vrcp.pop %v1831
        %v1844 = vrcp.pop %v1834
        %v1845 = vrcp.pop %v1837
        %v1846 = vmul.f32 %v1799, %v1838
        %v1847 = vmul.f32 %v1801, %v1839
        %v1848 = vmul.f32 %v1803, %v1840
        %v1849 = vmul.f32 %v1805, %v1841
        %v1850 = vmul.f32 %v1807, %v1842
        %v1851 = vmul.f32 %v1809, %v1843
        %v1852 = vmul.f32 %v1811, %v1844
        %v1853 = vmul.f32 %v1813, %v1845
        %v1854 = vpack.c.bf16 %v1846, %v1846
        %v1855 = vpack.c.bf16 %v1847, %v1847
        %v1856 = vpack.c.bf16 %v1848, %v1848
        %v1857 = vpack.c.bf16 %v1849, %v1849
        %v1858 = vpack.c.bf16 %v1850, %v1850
        %v1859 = vpack.c.bf16 %v1851, %v1851
        %v1860 = vpack.c.bf16 %v1852, %v1852
        %v1861 = vpack.c.bf16 %v1853, %v1853
        %v1863 = vsel %vm1397, %v1854, 0
        %vm1865 = vcmask 1043456
        %v1867 = vsel %vm1865, %v1375, 0
        %1869 = vmatprep.subr.bf16.mxu0 0
        %1870 = vmatpush1.bf16.msra.mxu0 %v1867
        %1871 = vmatprep.subr.bf16.mxu0 0
        %1872 = vmatpush1.bf16.msra.mxu0 0
        %1873 = vmatprep.subr.bf16.mxu0 0
        %1874 = vmatpush1.bf16.msra.mxu0 0
        %1875 = vmatprep.subr.bf16.mxu0 0
        %1876 = vmatpush1.bf16.msra.mxu0 0
        %1877 = vmatprep.subr.bf16.mxu0 0
        %1878 = vmatpush1.bf16.msra.mxu0 0
        %1879 = vmatprep.subr.bf16.mxu0 0
        %1880 = vmatpush1.bf16.msra.mxu0 0
        %1881 = vmatprep.subr.bf16.mxu0 0
        %1882 = vmatpush1.bf16.msra.mxu0 0
        %1883 = vmatprep.subr.bf16.mxu0 0
        %1884 = vmatpush1.bf16.msra.mxu0 0
        %1885 = vmatprep.subr.bf16.mxu0 0
        %1886 = vmatpush1.bf16.msra.mxu0 0
        %1887 = vmatprep.subr.bf16.mxu0 0
        %1888 = vmatpush1.bf16.msra.mxu0 0
        %1889 = vmatprep.subr.bf16.mxu0 0
        %1890 = vmatpush1.bf16.msra.mxu0 0
        %1891 = vmatprep.subr.bf16.mxu0 0
        %1892 = vmatpush1.bf16.msra.mxu0 0
        %1893 = vmatprep.subr.bf16.mxu0 0
        %1894 = vmatpush1.bf16.msra.mxu0 0
        %1895 = vmatprep.subr.bf16.mxu0 0
        %1896 = vmatpush1.bf16.msra.mxu0 0
        %1897 = vmatprep.subr.bf16.mxu0 0
        %1898 = vmatpush1.bf16.msra.mxu0 0
        %1899 = vmatprep.subr.bf16.mxu0 0
        %1900 = vmatpush1.bf16.msra.mxu0 0
        %1901 = vmatprep.mubr.bf16.mxu0 0
        %1902 = vmatmul.mubr.bf16.gmra.mrb[0].mxu0 %v1863
        %v1903 = vpop.f32.mrb[0].mxu0
        %v1904 = vadd.f32 0.0, %v1903
        %v1905 = vpop.f32.mrb[0].mxu0
        %v1906 = vpop.f32.mrb[0].mxu0
        %v1907 = vpop.f32.mrb[0].mxu0
        %1908 = vdwg.mxu0
        %v1910 = vsel %vm1397, %v1855, 0
        %v1913 = vsel %vm1865, %v1376, 0
        %1915 = vmatprep.subr.bf16.mxu0 0
        %1916 = vmatpush1.bf16.msra.mxu0 %v1913
        %1917 = vmatprep.subr.bf16.mxu0 0
        %1918 = vmatpush1.bf16.msra.mxu0 0
        %1919 = vmatprep.subr.bf16.mxu0 0
        %1920 = vmatpush1.bf16.msra.mxu0 0
        %1921 = vmatprep.subr.bf16.mxu0 0
        %1922 = vmatpush1.bf16.msra.mxu0 0
        %1923 = vmatprep.subr.bf16.mxu0 0
        %1924 = vmatpush1.bf16.msra.mxu0 0
        %1925 = vmatprep.subr.bf16.mxu0 0
        %1926 = vmatpush1.bf16.msra.mxu0 0
        %1927 = vmatprep.subr.bf16.mxu0 0
        %1928 = vmatpush1.bf16.msra.mxu0 0
        %1929 = vmatprep.subr.bf16.mxu0 0
        %1930 = vmatpush1.bf16.msra.mxu0 0
        %1931 = vmatprep.subr.bf16.mxu0 0
        %1932 = vmatpush1.bf16.msra.mxu0 0
        %1933 = vmatprep.subr.bf16.mxu0 0
        %1934 = vmatpush1.bf16.msra.mxu0 0
        %1935 = vmatprep.subr.bf16.mxu0 0
        %1936 = vmatpush1.bf16.msra.mxu0 0
        %1937 = vmatprep.subr.bf16.mxu0 0
        %1938 = vmatpush1.bf16.msra.mxu0 0
        %1939 = vmatprep.subr.bf16.mxu0 0
        %1940 = vmatpush1.bf16.msra.mxu0 0
        %1941 = vmatprep.subr.bf16.mxu0 0
        %1942 = vmatpush1.bf16.msra.mxu0 0
        %1943 = vmatprep.subr.bf16.mxu0 0
        %1944 = vmatpush1.bf16.msra.mxu0 0
        %1945 = vmatprep.subr.bf16.mxu0 0
        %1946 = vmatpush1.bf16.msra.mxu0 0
        %1947 = vmatprep.mubr.bf16.mxu0 0
        %1948 = vmatmul.mubr.bf16.gmra.mrb[0].mxu0 %v1910
        %v1949 = vpop.f32.mrb[0].mxu0
        %v1950 = vadd.f32 0.0, %v1949
        %v1951 = vpop.f32.mrb[0].mxu0
        %v1952 = vpop.f32.mrb[0].mxu0
        %v1953 = vpop.f32.mrb[0].mxu0
        %1954 = vdwg.mxu0
        %v1956 = vsel %vm1397, %v1856, 0
        %v1959 = vsel %vm1865, %v1377, 0
        %1961 = vmatprep.subr.bf16.mxu0 0
        %1962 = vmatpush1.bf16.msra.mxu0 %v1959
        %1963 = vmatprep.subr.bf16.mxu0 0
        %1964 = vmatpush1.bf16.msra.mxu0 0
        %1965 = vmatprep.subr.bf16.mxu0 0
        %1966 = vmatpush1.bf16.msra.mxu0 0
        %1967 = vmatprep.subr.bf16.mxu0 0
        %1968 = vmatpush1.bf16.msra.mxu0 0
        %1969 = vmatprep.subr.bf16.mxu0 0
        %1970 = vmatpush1.bf16.msra.mxu0 0
        %1971 = vmatprep.subr.bf16.mxu0 0
        %1972 = vmatpush1.bf16.msra.mxu0 0
        %1973 = vmatprep.subr.bf16.mxu0 0
        %1974 = vmatpush1.bf16.msra.mxu0 0
        %1975 = vmatprep.subr.bf16.mxu0 0
        %1976 = vmatpush1.bf16.msra.mxu0 0
        %1977 = vmatprep.subr.bf16.mxu0 0
        %1978 = vmatpush1.bf16.msra.mxu0 0
        %1979 = vmatprep.subr.bf16.mxu0 0
        %1980 = vmatpush1.bf16.msra.mxu0 0
        %1981 = vmatprep.subr.bf16.mxu0 0
        %1982 = vmatpush1.bf16.msra.mxu0 0
        %1983 = vmatprep.subr.bf16.mxu0 0
        %1984 = vmatpush1.bf16.msra.mxu0 0
        %1985 = vmatprep.subr.bf16.mxu0 0
        %1986 = vmatpush1.bf16.msra.mxu0 0
        %1987 = vmatprep.subr.bf16.mxu0 0
        %1988 = vmatpush1.bf16.msra.mxu0 0
        %1989 = vmatprep.subr.bf16.mxu0 0
        %1990 = vmatpush1.bf16.msra.mxu0 0
        %1991 = vmatprep.subr.bf16.mxu0 0
        %1992 = vmatpush1.bf16.msra.mxu0 0
        %1993 = vmatprep.mubr.bf16.mxu0 0
        %1994 = vmatmul.mubr.bf16.gmra.mrb[0].mxu0 %v1956
        %v1995 = vpop.f32.mrb[0].mxu0
        %v1996 = vadd.f32 0.0, %v1995
        %v1997 = vpop.f32.mrb[0].mxu0
        %v1998 = vpop.f32.mrb[0].mxu0
        %v1999 = vpop.f32.mrb[0].mxu0
        %2000 = vdwg.mxu0
        %v2002 = vsel %vm1397, %v1857, 0
        %v2005 = vsel %vm1865, %v1378, 0
        %2007 = vmatprep.subr.bf16.mxu0 0
        %2008 = vmatpush1.bf16.msra.mxu0 %v2005
        %2009 = vmatprep.subr.bf16.mxu0 0
        %2010 = vmatpush1.bf16.msra.mxu0 0
        %2011 = vmatprep.subr.bf16.mxu0 0
        %2012 = vmatpush1.bf16.msra.mxu0 0
        %2013 = vmatprep.subr.bf16.mxu0 0
        %2014 = vmatpush1.bf16.msra.mxu0 0
        %2015 = vmatprep.subr.bf16.mxu0 0
        %2016 = vmatpush1.bf16.msra.mxu0 0
        %2017 = vmatprep.subr.bf16.mxu0 0
        %2018 = vmatpush1.bf16.msra.mxu0 0
        %2019 = vmatprep.subr.bf16.mxu0 0
        %2020 = vmatpush1.bf16.msra.mxu0 0
        %2021 = vmatprep.subr.bf16.mxu0 0
        %2022 = vmatpush1.bf16.msra.mxu0 0
        %2023 = vmatprep.subr.bf16.mxu0 0
        %2024 = vmatpush1.bf16.msra.mxu0 0
        %2025 = vmatprep.subr.bf16.mxu0 0
        %2026 = vmatpush1.bf16.msra.mxu0 0
        %2027 = vmatprep.subr.bf16.mxu0 0
        %2028 = vmatpush1.bf16.msra.mxu0 0
        %2029 = vmatprep.subr.bf16.mxu0 0
        %2030 = vmatpush1.bf16.msra.mxu0 0
        %2031 = vmatprep.subr.bf16.mxu0 0
        %2032 = vmatpush1.bf16.msra.mxu0 0
        %2033 = vmatprep.subr.bf16.mxu0 0
        %2034 = vmatpush1.bf16.msra.mxu0 0
        %2035 = vmatprep.subr.bf16.mxu0 0
        %2036 = vmatpush1.bf16.msra.mxu0 0
        %2037 = vmatprep.subr.bf16.mxu0 0
        %2038 = vmatpush1.bf16.msra.mxu0 0
        %2039 = vmatprep.mubr.bf16.mxu0 0
        %2040 = vmatmul.mubr.bf16.gmra.mrb[0].mxu0 %v2002
        %v2041 = vpop.f32.mrb[0].mxu0
        %v2042 = vadd.f32 0.0, %v2041
        %v2043 = vpop.f32.mrb[0].mxu0
        %v2044 = vpop.f32.mrb[0].mxu0
        %v2045 = vpop.f32.mrb[0].mxu0
        %2046 = vdwg.mxu0
        %v2048 = vsel %vm1397, %v1858, 0
        %v2051 = vsel %vm1865, %v1379, 0
        %2053 = vmatprep.subr.bf16.mxu0 0
        %2054 = vmatpush1.bf16.msra.mxu0 %v2051
        %2055 = vmatprep.subr.bf16.mxu0 0
        %2056 = vmatpush1.bf16.msra.mxu0 0
        %2057 = vmatprep.subr.bf16.mxu0 0
        %2058 = vmatpush1.bf16.msra.mxu0 0
        %2059 = vmatprep.subr.bf16.mxu0 0
        %2060 = vmatpush1.bf16.msra.mxu0 0
        %2061 = vmatprep.subr.bf16.mxu0 0
        %2062 = vmatpush1.bf16.msra.mxu0 0
        %2063 = vmatprep.subr.bf16.mxu0 0
        %2064 = vmatpush1.bf16.msra.mxu0 0
        %2065 = vmatprep.subr.bf16.mxu0 0
        %2066 = vmatpush1.bf16.msra.mxu0 0
        %2067 = vmatprep.subr.bf16.mxu0 0
        %2068 = vmatpush1.bf16.msra.mxu0 0
        %2069 = vmatprep.subr.bf16.mxu0 0
        %2070 = vmatpush1.bf16.msra.mxu0 0
        %2071 = vmatprep.subr.bf16.mxu0 0
        %2072 = vmatpush1.bf16.msra.mxu0 0
        %2073 = vmatprep.subr.bf16.mxu0 0
        %2074 = vmatpush1.bf16.msra.mxu0 0
        %2075 = vmatprep.subr.bf16.mxu0 0
        %2076 = vmatpush1.bf16.msra.mxu0 0
        %2077 = vmatprep.subr.bf16.mxu0 0
        %2078 = vmatpush1.bf16.msra.mxu0 0
        %2079 = vmatprep.subr.bf16.mxu0 0
        %2080 = vmatpush1.bf16.msra.mxu0 0
        %2081 = vmatprep.subr.bf16.mxu0 0
        %2082 = vmatpush1.bf16.msra.mxu0 0
        %2083 = vmatprep.subr.bf16.mxu0 0
        %2084 = vmatpush1.bf16.msra.mxu0 0
        %2085 = vmatprep.mubr.bf16.mxu0 0
        %2086 = vmatmul.mubr.bf16.gmra.mrb[0].mxu0 %v2048
        %v2087 = vpop.f32.mrb[0].mxu0
        %v2088 = vadd.f32 0.0, %v2087
        %v2089 = vpop.f32.mrb[0].mxu0
        %v2090 = vpop.f32.mrb[0].mxu0
        %v2091 = vpop.f32.mrb[0].mxu0
        %2092 = vdwg.mxu0
        %v2094 = vsel %vm1397, %v1859, 0
        %v2097 = vsel %vm1865, %v1380, 0
        %2099 = vmatprep.subr.bf16.mxu0 0
        %2100 = vmatpush1.bf16.msra.mxu0 %v2097
        %2101 = vmatprep.subr.bf16.mxu0 0
        %2102 = vmatpush1.bf16.msra.mxu0 0
        %2103 = vmatprep.subr.bf16.mxu0 0
        %2104 = vmatpush1.bf16.msra.mxu0 0
        %2105 = vmatprep.subr.bf16.mxu0 0
        %2106 = vmatpush1.bf16.msra.mxu0 0
        %2107 = vmatprep.subr.bf16.mxu0 0
        %2108 = vmatpush1.bf16.msra.mxu0 0
        %2109 = vmatprep.subr.bf16.mxu0 0
        %2110 = vmatpush1.bf16.msra.mxu0 0
        %2111 = vmatprep.subr.bf16.mxu0 0
        %2112 = vmatpush1.bf16.msra.mxu0 0
        %2113 = vmatprep.subr.bf16.mxu0 0
        %2114 = vmatpush1.bf16.msra.mxu0 0
        %2115 = vmatprep.subr.bf16.mxu0 0
        %2116 = vmatpush1.bf16.msra.mxu0 0
        %2117 = vmatprep.subr.bf16.mxu0 0
        %2118 = vmatpush1.bf16.msra.mxu0 0
        %2119 = vmatprep.subr.bf16.mxu0 0
        %2120 = vmatpush1.bf16.msra.mxu0 0
        %2121 = vmatprep.subr.bf16.mxu0 0
        %2122 = vmatpush1.bf16.msra.mxu0 0
        %2123 = vmatprep.subr.bf16.mxu0 0
        %2124 = vmatpush1.bf16.msra.mxu0 0
        %2125 = vmatprep.subr.bf16.mxu0 0
        %2126 = vmatpush1.bf16.msra.mxu0 0
        %2127 = vmatprep.subr.bf16.mxu0 0
        %2128 = vmatpush1.bf16.msra.mxu0 0
        %2129 = vmatprep.subr.bf16.mxu0 0
        %2130 = vmatpush1.bf16.msra.mxu0 0
        %2131 = vmatprep.mubr.bf16.mxu0 0
        %2132 = vmatmul.mubr.bf16.gmra.mrb[0].mxu0 %v2094
        %v2133 = vpop.f32.mrb[0].mxu0
        %v2134 = vadd.f32 0.0, %v2133
        %v2135 = vpop.f32.mrb[0].mxu0
        %v2136 = vpop.f32.mrb[0].mxu0
        %v2137 = vpop.f32.mrb[0].mxu0
        %2138 = vdwg.mxu0
        %v2140 = vsel %vm1397, %v1860, 0
        %v2143 = vsel %vm1865, %v1381, 0
        %2145 = vmatprep.subr.bf16.mxu0 0
        %2146 = vmatpush1.bf16.msra.mxu0 %v2143
        %2147 = vmatprep.subr.bf16.mxu0 0
        %2148 = vmatpush1.bf16.msra.mxu0 0
        %2149 = vmatprep.subr.bf16.mxu0 0
        %2150 = vmatpush1.bf16.msra.mxu0 0
        %2151 = vmatprep.subr.bf16.mxu0 0
        %2152 = vmatpush1.bf16.msra.mxu0 0
        %2153 = vmatprep.subr.bf16.mxu0 0
        %2154 = vmatpush1.bf16.msra.mxu0 0
        %2155 = vmatprep.subr.bf16.mxu0 0
        %2156 = vmatpush1.bf16.msra.mxu0 0
        %2157 = vmatprep.subr.bf16.mxu0 0
        %2158 = vmatpush1.bf16.msra.mxu0 0
        %2159 = vmatprep.subr.bf16.mxu0 0
        %2160 = vmatpush1.bf16.msra.mxu0 0
        %2161 = vmatprep.subr.bf16.mxu0 0
        %2162 = vmatpush1.bf16.msra.mxu0 0
        %2163 = vmatprep.subr.bf16.mxu0 0
        %2164 = vmatpush1.bf16.msra.mxu0 0
        %2165 = vmatprep.subr.bf16.mxu0 0
        %2166 = vmatpush1.bf16.msra.mxu0 0
        %2167 = vmatprep.subr.bf16.mxu0 0
        %2168 = vmatpush1.bf16.msra.mxu0 0
        %2169 = vmatprep.subr.bf16.mxu0 0
        %2170 = vmatpush1.bf16.msra.mxu0 0
        %2171 = vmatprep.subr.bf16.mxu0 0
        %2172 = vmatpush1.bf16.msra.mxu0 0
        %2173 = vmatprep.subr.bf16.mxu0 0
        %2174 = vmatpush1.bf16.msra.mxu0 0
        %2175 = vmatprep.subr.bf16.mxu0 0
        %2176 = vmatpush1.bf16.msra.mxu0 0
        %2177 = vmatprep.mubr.bf16.mxu0 0
        %2178 = vmatmul.mubr.bf16.gmra.mrb[0].mxu0 %v2140
        %v2179 = vpop.f32.mrb[0].mxu0
        %v2180 = vadd.f32 0.0, %v2179
        %v2181 = vpop.f32.mrb[0].mxu0
        %v2182 = vpop.f32.mrb[0].mxu0
        %v2183 = vpop.f32.mrb[0].mxu0
        %2184 = vdwg.mxu0
        %v2186 = vsel %vm1397, %v1861, 0
        %v2189 = vsel %vm1865, %v1382, 0
        %2191 = vmatprep.subr.bf16.mxu0 0
        %2192 = vmatpush1.bf16.msra.mxu0 %v2189
        %2193 = vmatprep.subr.bf16.mxu0 0
        %2194 = vmatpush1.bf16.msra.mxu0 0
        %2195 = vmatprep.subr.bf16.mxu0 0
        %2196 = vmatpush1.bf16.msra.mxu0 0
        %2197 = vmatprep.subr.bf16.mxu0 0
        %2198 = vmatpush1.bf16.msra.mxu0 0
        %2199 = vmatprep.subr.bf16.mxu0 0
        %2200 = vmatpush1.bf16.msra.mxu0 0
        %2201 = vmatprep.subr.bf16.mxu0 0
        %2202 = vmatpush1.bf16.msra.mxu0 0
        %2203 = vmatprep.subr.bf16.mxu0 0
        %2204 = vmatpush1.bf16.msra.mxu0 0
        %2205 = vmatprep.subr.bf16.mxu0 0
        %2206 = vmatpush1.bf16.msra.mxu0 0
        %2207 = vmatprep.subr.bf16.mxu0 0
        %2208 = vmatpush1.bf16.msra.mxu0 0
        %2209 = vmatprep.subr.bf16.mxu0 0
        %2210 = vmatpush1.bf16.msra.mxu0 0
        %2211 = vmatprep.subr.bf16.mxu0 0
        %2212 = vmatpush1.bf16.msra.mxu0 0
        %2213 = vmatprep.subr.bf16.mxu0 0
        %2214 = vmatpush1.bf16.msra.mxu0 0
        %2215 = vmatprep.subr.bf16.mxu0 0
        %2216 = vmatpush1.bf16.msra.mxu0 0
        %2217 = vmatprep.subr.bf16.mxu0 0
        %2218 = vmatpush1.bf16.msra.mxu0 0
        %2219 = vmatprep.subr.bf16.mxu0 0
        %2220 = vmatpush1.bf16.msra.mxu0 0
        %2221 = vmatprep.subr.bf16.mxu0 0
        %2222 = vmatpush1.bf16.msra.mxu0 0
        %2223 = vmatprep.mubr.bf16.mxu0 0
        %2224 = vmatmul.mubr.bf16.gmra.mrb[0].mxu0 %v2186
        %v2225 = vpop.f32.mrb[0].mxu0
        %v2226 = vadd.f32 0.0, %v2225
        %v2227 = vpop.f32.mrb[0].mxu0
        %v2228 = vpop.f32.mrb[0].mxu0
        %v2229 = vpop.f32.mrb[0].mxu0
        %2230 = vdwg.mxu0
        %v2231 = vpack.c.bf16 %v1904, %v1904
        %v2232 = vpack.c.bf16 %v1950, %v1950
        %v2233 = vpack.c.bf16 %v1996, %v1996
        %v2234 = vpack.c.bf16 %v2042, %v2042
        %v2235 = vpack.c.bf16 %v2088, %v2088
        %v2236 = vpack.c.bf16 %v2134, %v2134
        %v2237 = vpack.c.bf16 %v2180, %v2180
        %v2238 = vpack.c.bf16 %v2226, %v2226
        %v2239 = vld [vmem:[%s10] sm:$0xf]
        %v2240 = vld [vmem:[%s10 + $0x4] sm:$0xf]
        %v2241 = vld [vmem:[%s10 + $0x8] sm:$0xf]
        %v2242 = vld [vmem:[%s10 + $0xc] sm:$0xf]
        %v2245 = vunpack.c.l.b16 %v2231
        %v2246 = vunpack.c.l.b16 %v2232
        %v2247 = vpack.c.b16 %v2246, %v2245
        %v2249 = vsel %vm1397, %v2247, 0
        %v2252 = vsel %vm1865, %v2239, 0
        %2254 = vmatprep.subr.bf16.mxu0 0
        %2255 = vmatpush1.bf16.msra.mxu0 %v2252
        %2256 = vmatprep.subr.bf16.mxu0 0
        %2257 = vmatpush1.bf16.msra.mxu0 0
        %2258 = vmatprep.subr.bf16.mxu0 0
        %2259 = vmatpush1.bf16.msra.mxu0 0
        %2260 = vmatprep.subr.bf16.mxu0 0
        %2261 = vmatpush1.bf16.msra.mxu0 0
        %2262 = vmatprep.subr.bf16.mxu0 0
        %2263 = vmatpush1.bf16.msra.mxu0 0
        %2264 = vmatprep.subr.bf16.mxu0 0
        %2265 = vmatpush1.bf16.msra.mxu0 0
        %2266 = vmatprep.subr.bf16.mxu0 0
        %2267 = vmatpush1.bf16.msra.mxu0 0
        %2268 = vmatprep.subr.bf16.mxu0 0
        %2269 = vmatpush1.bf16.msra.mxu0 0
        %2270 = vmatprep.subr.bf16.mxu0 0
        %2271 = vmatpush1.bf16.msra.mxu0 0
        %2272 = vmatprep.subr.bf16.mxu0 0
        %2273 = vmatpush1.bf16.msra.mxu0 0
        %2274 = vmatprep.subr.bf16.mxu0 0
        %2275 = vmatpush1.bf16.msra.mxu0 0
        %2276 = vmatprep.subr.bf16.mxu0 0
        %2277 = vmatpush1.bf16.msra.mxu0 0
        %2278 = vmatprep.subr.bf16.mxu0 0
        %2279 = vmatpush1.bf16.msra.mxu0 0
        %2280 = vmatprep.subr.bf16.mxu0 0
        %2281 = vmatpush1.bf16.msra.mxu0 0
        %2282 = vmatprep.subr.bf16.mxu0 0
        %2283 = vmatpush1.bf16.msra.mxu0 0
        %2284 = vmatprep.subr.bf16.mxu0 0
        %2285 = vmatpush1.bf16.msra.mxu0 0
        %2286 = vmatprep.mubr.bf16.mxu0 0
        %2287 = vmatmul.mubr.bf16.gmra.mrb[0].mxu0 %v2249
        %v2288 = vpop.f32.mrb[0].mxu0
        %v2289 = vadd.f32 0.0, %v2288
        %v2290 = vpop.f32.mrb[0].mxu0
        %v2291 = vpop.f32.mrb[0].mxu0
        %v2292 = vadd.f32 0.0, %v2291
        %v2293 = vpop.f32.mrb[0].mxu0
        %2294 = vdwg.mxu0
        %v2297 = vunpack.c.l.b16 %v2233
        %v2298 = vunpack.c.l.b16 %v2234
        %v2299 = vpack.c.b16 %v2298, %v2297
        %v2301 = vsel %vm1397, %v2299, 0
        %v2304 = vsel %vm1865, %v2240, 0
        %2306 = vmatprep.subr.bf16.mxu0 0
        %2307 = vmatpush1.bf16.msra.mxu0 %v2304
        %2308 = vmatprep.subr.bf16.mxu0 0
        %2309 = vmatpush1.bf16.msra.mxu0 0
        %2310 = vmatprep.subr.bf16.mxu0 0
        %2311 = vmatpush1.bf16.msra.mxu0 0
        %2312 = vmatprep.subr.bf16.mxu0 0
        %2313 = vmatpush1.bf16.msra.mxu0 0
        %2314 = vmatprep.subr.bf16.mxu0 0
        %2315 = vmatpush1.bf16.msra.mxu0 0
        %2316 = vmatprep.subr.bf16.mxu0 0
        %2317 = vmatpush1.bf16.msra.mxu0 0
        %2318 = vmatprep.subr.bf16.mxu0 0
        %2319 = vmatpush1.bf16.msra.mxu0 0
        %2320 = vmatprep.subr.bf16.mxu0 0
        %2321 = vmatpush1.bf16.msra.mxu0 0
        %2322 = vmatprep.subr.bf16.mxu0 0
        %2323 = vmatpush1.bf16.msra.mxu0 0
        %2324 = vmatprep.subr.bf16.mxu0 0
        %2325 = vmatpush1.bf16.msra.mxu0 0
        %2326 = vmatprep.subr.bf16.mxu0 0
        %2327 = vmatpush1.bf16.msra.mxu0 0
        %2328 = vmatprep.subr.bf16.mxu0 0
        %2329 = vmatpush1.bf16.msra.mxu0 0
        %2330 = vmatprep.subr.bf16.mxu0 0
        %2331 = vmatpush1.bf16.msra.mxu0 0
        %2332 = vmatprep.subr.bf16.mxu0 0
        %2333 = vmatpush1.bf16.msra.mxu0 0
        %2334 = vmatprep.subr.bf16.mxu0 0
        %2335 = vmatpush1.bf16.msra.mxu0 0
        %2336 = vmatprep.subr.bf16.mxu0 0
        %2337 = vmatpush1.bf16.msra.mxu0 0
        %2338 = vmatprep.mubr.bf16.mxu0 0
        %2339 = vmatmul.mubr.bf16.gmra.mrb[0].mxu0 %v2301
        %v2340 = vpop.f32.mrb[0].mxu0
        %v2341 = vadd.f32 0.0, %v2340
        %v2342 = vpop.f32.mrb[0].mxu0
        %v2343 = vpop.f32.mrb[0].mxu0
        %v2344 = vadd.f32 0.0, %v2343
        %v2345 = vpop.f32.mrb[0].mxu0
        %2346 = vdwg.mxu0
        %v2349 = vunpack.c.l.b16 %v2235
        %v2350 = vunpack.c.l.b16 %v2236
        %v2351 = vpack.c.b16 %v2350, %v2349
        %v2353 = vsel %vm1397, %v2351, 0
        %v2356 = vsel %vm1865, %v2241, 0
        %2358 = vmatprep.subr.bf16.mxu0 0
        %2359 = vmatpush1.bf16.msra.mxu0 %v2356
        %2360 = vmatprep.subr.bf16.mxu0 0
        %2361 = vmatpush1.bf16.msra.mxu0 0
        %2362 = vmatprep.subr.bf16.mxu0 0
        %2363 = vmatpush1.bf16.msra.mxu0 0
        %2364 = vmatprep.subr.bf16.mxu0 0
        %2365 = vmatpush1.bf16.msra.mxu0 0
        %2366 = vmatprep.subr.bf16.mxu0 0
        %2367 = vmatpush1.bf16.msra.mxu0 0
        %2368 = vmatprep.subr.bf16.mxu0 0
        %2369 = vmatpush1.bf16.msra.mxu0 0
        %2370 = vmatprep.subr.bf16.mxu0 0
        %2371 = vmatpush1.bf16.msra.mxu0 0
        %2372 = vmatprep.subr.bf16.mxu0 0
        %2373 = vmatpush1.bf16.msra.mxu0 0
        %2374 = vmatprep.subr.bf16.mxu0 0
        %2375 = vmatpush1.bf16.msra.mxu0 0
        %2376 = vmatprep.subr.bf16.mxu0 0
        %2377 = vmatpush1.bf16.msra.mxu0 0
        %2378 = vmatprep.subr.bf16.mxu0 0
        %2379 = vmatpush1.bf16.msra.mxu0 0
        %2380 = vmatprep.subr.bf16.mxu0 0
        %2381 = vmatpush1.bf16.msra.mxu0 0
        %2382 = vmatprep.subr.bf16.mxu0 0
        %2383 = vmatpush1.bf16.msra.mxu0 0
        %2384 = vmatprep.subr.bf16.mxu0 0
        %2385 = vmatpush1.bf16.msra.mxu0 0
        %2386 = vmatprep.subr.bf16.mxu0 0
        %2387 = vmatpush1.bf16.msra.mxu0 0
        %2388 = vmatprep.subr.bf16.mxu0 0
        %2389 = vmatpush1.bf16.msra.mxu0 0
        %2390 = vmatprep.mubr.bf16.mxu0 0
        %2391 = vmatmul.mubr.bf16.gmra.mrb[0].mxu0 %v2353
        %v2392 = vpop.f32.mrb[0].mxu0
        %v2393 = vadd.f32 0.0, %v2392
        %v2394 = vpop.f32.mrb[0].mxu0
        %v2395 = vpop.f32.mrb[0].mxu0
        %v2396 = vadd.f32 0.0, %v2395
        %v2397 = vpop.f32.mrb[0].mxu0
        %2398 = vdwg.mxu0
        %v2401 = vunpack.c.l.b16 %v2237
        %v2402 = vunpack.c.l.b16 %v2238
        %v2403 = vpack.c.b16 %v2402, %v2401
        %v2405 = vsel %vm1397, %v2403, 0
        %v2408 = vsel %vm1865, %v2242, 0
        %2410 = vmatprep.subr.bf16.mxu0 0
        %2411 = vmatpush1.bf16.msra.mxu0 %v2408
        %2412 = vmatprep.subr.bf16.mxu0 0
        %2413 = vmatpush1.bf16.msra.mxu0 0
        %2414 = vmatprep.subr.bf16.mxu0 0
        %2415 = vmatpush1.bf16.msra.mxu0 0
        %2416 = vmatprep.subr.bf16.mxu0 0
        %2417 = vmatpush1.bf16.msra.mxu0 0
        %2418 = vmatprep.subr.bf16.mxu0 0
        %2419 = vmatpush1.bf16.msra.mxu0 0
        %2420 = vmatprep.subr.bf16.mxu0 0
        %2421 = vmatpush1.bf16.msra.mxu0 0
        %2422 = vmatprep.subr.bf16.mxu0 0
        %2423 = vmatpush1.bf16.msra.mxu0 0
        %2424 = vmatprep.subr.bf16.mxu0 0
        %2425 = vmatpush1.bf16.msra.mxu0 0
        %2426 = vmatprep.subr.bf16.mxu0 0
        %2427 = vmatpush1.bf16.msra.mxu0 0
        %2428 = vmatprep.subr.bf16.mxu0 0
        %2429 = vmatpush1.bf16.msra.mxu0 0
        %2430 = vmatprep.subr.bf16.mxu0 0
        %2431 = vmatpush1.bf16.msra.mxu0 0
        %2432 = vmatprep.subr.bf16.mxu0 0
        %2433 = vmatpush1.bf16.msra.mxu0 0
        %2434 = vmatprep.subr.bf16.mxu0 0
        %2435 = vmatpush1.bf16.msra.mxu0 0
        %2436 = vmatprep.subr.bf16.mxu0 0
        %2437 = vmatpush1.bf16.msra.mxu0 0
        %2438 = vmatprep.subr.bf16.mxu0 0
        %2439 = vmatpush1.bf16.msra.mxu0 0
        %2440 = vmatprep.subr.bf16.mxu0 0
        %2441 = vmatpush1.bf16.msra.mxu0 0
        %2442 = vmatprep.mubr.bf16.mxu0 0
        %2443 = vmatmul.mubr.bf16.gmra.mrb[0].mxu0 %v2405
        %v2444 = vpop.f32.mrb[0].mxu0
        %v2445 = vadd.f32 0.0, %v2444
        %v2446 = vpop.f32.mrb[0].mxu0
        %v2447 = vpop.f32.mrb[0].mxu0
        %v2448 = vadd.f32 0.0, %v2447
        %v2449 = vpop.f32.mrb[0].mxu0
        %2450 = vdwg.mxu0
        %v2451 = vsel %vm502, %v2289, 0.0
        %v2452 = vsel %vm502, %v2341, 0.0
        %v2453 = vadd.f32 %v2451, %v2452
        %v2454 = vsel %vm502, %v2393, 0.0
        %v2455 = vadd.f32 %v2453, %v2454
        %v2456 = vsel %vm502, %v2445, 0.0
        %v2457 = vadd.f32 %v2455, %v2456
        %v2458 = vsel %vm502, %v2292, 0.0
        %v2459 = vsel %vm502, %v2344, 0.0
        %v2460 = vadd.f32 %v2458, %v2459
        %v2461 = vsel %vm502, %v2396, 0.0
        %v2462 = vadd.f32 %v2460, %v2461
        %v2463 = vsel %vm502, %v2448, 0.0
        %v2464 = vadd.f32 %v2462, %v2463
        %v2465 = vld [vmem:[%s11] sm:$0x1]
        %v2467 = vlaneseq
        %v2468 = vshrl.u32 %v2467, 7
        %v2469 = vsub.s32 0, %v2468
        %v2470 = vrot.slane %v2465, %v2469
        %v2472 = vadd.f32 %v2457, %v2470
        %v2473 = vadd.f32 %v2464, %v2470
        %2474 = vst.msk [vmem:[%s453] sm:$0xff] %vm502, %v2472
        %2475 = vst.msk [vmem:[%s453 + $0x8] sm:$0xff] %vm502, %v2473
        %s2476 = sand.u32 %s306, 1
        %s2477 = scalar_lea.sflag [#allocation3], %s2476
        %s2478 = sand.u32 %s306, 1
        %s2479 = smul.addr %s2478, 16
        %s2480 = scalar_lea.vmem [#allocation2], %s2479
        // Predicated region
        $region69: #{tpu_custom_call.1} parent=67 // pred_check
          %p2481 = pneg %p316
        $region70: #{tpu_custom_call.1} parent=67 // pred_check_branch
          %2483 = sbr.rel (%p2481) target = $region72
        $region71: #{tpu_custom_call.1} parent=67 // pred_region
          %s2484 = smul.u32 2, %s26
          %s2486 = ssub.s32 256, 256
          %2487 = vsyncadd %s2477, %s2486
          %s2488 = smul.addr %s2484, 128
          %s2489 = scalar_lea.hbm %s12, %s2488
          %s2490 = sshll.u32 %s2480, 4
          %s2491 = int_to_ptr.vmem [resolvable:$true] %s2490
          %2496 = dma.vmem_to_hbm [thread:$0]  %s2491, 256, %s2489, %s2477, 128, 128, 8
        $region72: #{tpu_custom_call.1} parent=67 // pred_fallthru
          _
      $region68: #{tpu_custom_call.1} parent=5 // pred_fallthru
        _
      %p2497 = scmp.le.s32.totalorder 2, %s21
      // Predicated region
      $region73: #{tpu_custom_call.1} parent=5 // pred_check
        %p2498 = pneg %p2497
      $region74: #{tpu_custom_call.1} parent=5 // pred_check_branch
        %2500 = sbr.rel (%p2498) target = $region76
      $region75: #{tpu_custom_call.1} parent=5 // pred_region
        %s2501 = ssub.s32 %s21, 2
        // Predicated region
        $region77: #{tpu_custom_call.1} parent=75 // pred_check
          %p2502 = pneg %p322
        $region78: #{tpu_custom_call.1} parent=75 // pred_check_branch
          %2504 = sbr.rel (%p2502) target = $region80
        $region79: #{tpu_custom_call.1} parent=75 // pred_region
          %s2505 = sand.u32 %s307, 1
          %s2506 = scalar_lea.sflag [#allocation3], %s2505
          %s2507 = sand.u32 %s307, 1
          %s2508 = smul.addr %s2507, 16
          %s2509 = scalar_lea.vmem [#allocation2], %s2508
          %2510 = dma.done %s2506, 256
        $region80: #{tpu_custom_call.1} parent=75 // pred_fallthru
          _
      $region76: #{tpu_custom_call.1} parent=5 // pred_fallthru
        _
    $region6: #{tpu_custom_call.1} parent=1 // loop_footer
      %s25 = sadd.s32 1, %s21
    $region7: #{tpu_custom_call.1} parent=1 // loop_footer_branch
      %20 = sbr.rel target = $region3
    $region8: #{tpu_custom_call.1} parent=1 // loop_exit
      _
    %2511 = vsyncpa [#allocation3], 1
    %s2512 = scalar_lea.sflag [#allocation3], 1
    %2513 = vsyncpa %s2512, 1

</llo_original>
